<compile_context>
chip_gen: v6e
topology: v6e:2x2x1
jax: 0.10.0
libtpu: 0.0.40
codegen_flags: <defaults>
</compile_context>

<pallas_src>
import functools

import jax
import jax.numpy as jnp
from jax.experimental import pallas as pl
from jax.experimental.pallas import tpu as pltpu


def basic_conv2d_pallas(x_nchw, conv_w, conv_b, gamma, beta, run_mean, run_var,
                        *, stride=1, padding=1, eps=1e-5,
                        compute_dtype=jnp.float32, vmem_limit_bytes=None):
    """Forward of BasicConv2d (Conv2d + BatchNorm2d(eval) + ReLU).

    x_nchw: (N, Cin, H, W) float32. Returns (N, Cout, Ho, Wo) float32.
    """
    N, Cin, H, W = x_nchw.shape
    Cout, _, KH, KW = conv_w.shape
    Ho = (H + 2 * padding - KH) // stride + 1
    Wo = (W + 2 * padding - KW) // stride + 1
    Hp, Wp = H + 2 * padding, W + 2 * padding
    K = KH * KW * Cin                       # matmul contraction depth
    M = Ho * Wo                             # lane dim of matmul + output store
    h_span = stride * (Ho - 1) + 1
    w_span = stride * (Wo - 1) + 1
    Coutp = ((Cout + 7) // 8) * 8           # sublane padding only (NOT 128)

    # ---- fold BN (eval mode) + conv bias; fold scale into the weights ----
    scale = gamma / jnp.sqrt(run_var + eps)                      # (Cout,)
    bias = beta + (conv_b - run_mean) * scale                    # (Cout,)
    # (Cout, Cin, KH, KW) -> (Cout, KH, KW, Cin) -> (Cout, K); k=(kh,kw,ci).
    w2 = jnp.transpose(conv_w, (0, 2, 3, 1)).reshape(Cout, K) * scale[:, None]
    w2 = jnp.pad(w2, ((0, Coutp - Cout), (0, 0))).astype(compute_dtype)
    b2 = jnp.pad(bias, (0, Coutp - Cout)).reshape(Coutp, 1).astype(jnp.float32)
    xk = x_nchw.astype(compute_dtype)       # no-op copy for the default f32 path

    def kernel(x_ref, w_ref, b_ref, o_ref, xp_ref, pat_ref):
        # x_ref:   (1, Cin, H, W)    raw (unpadded) NCHW image
        # w_ref:   (Coutp, K)        BN-folded weights
        # b_ref:   (Coutp, 1)        folded bias (f32)
        # o_ref:   (1, Coutp, M)
        # xp_ref:  (Cin, Hp, Wp)     VMEM scratch: zero-padded image
        # pat_ref: (K, M)            VMEM scratch: patch matrix (lane dim = M)

        # In-kernel zero padding of the halo (no padded HBM copy of x).
        if padding > 0:
            xp_ref[...] = jnp.zeros_like(xp_ref)
            xp_ref[:, padding:padding + H, padding:padding + W] = x_ref[0]
        else:
            xp_ref[...] = x_ref[0]

        # Assemble the (K, M) patch matrix once.
        for kh in range(KH):
            for kw in range(KW):
                s = xp_ref[:, kh:kh + h_span, kw:kw + w_span]  # (Cin, h_span, w_span)
                if stride > 1:
                    s = s[:, ::stride, ::stride]               # (Cin, Ho, Wo)
                k0 = (kh * KW + kw) * Cin
                pat_ref[k0:k0 + Cin, :] = s.reshape(Cin, M)

        # One K-deep matmul (f32 accumulate) + fused bias + ReLU epilogue.
        y = jnp.dot(w_ref[...], pat_ref[...],
                    preferred_element_type=jnp.float32)         # (Coutp, M)
        y = jnp.maximum(y + b_ref[...], 0.0)
        o_ref[0] = y.astype(o_ref.dtype)

    out = pl.pallas_call(
        kernel,
        out_shape=jax.ShapeDtypeStruct((N, Coutp, M), jnp.float32),
        grid_spec=pltpu.PrefetchScalarGridSpec(
            num_scalar_prefetch=0,
            grid=(N,),
            in_specs=[
                pl.BlockSpec((1, Cin, H, W), lambda n: (n, 0, 0, 0)),
                pl.BlockSpec((Coutp, K), lambda n: (0, 0)),
                pl.BlockSpec((Coutp, 1), lambda n: (0, 0)),
            ],
            out_specs=pl.BlockSpec((1, Coutp, M), lambda n: (n, 0, 0)),
            scratch_shapes=[
                pltpu.VMEM((Cin, Hp, Wp), compute_dtype),   # padded image
                pltpu.VMEM((K, M), compute_dtype),          # patch matrix
            ],
        ),
        compiler_params=pltpu.CompilerParams(
            dimension_semantics=("parallel",),
            vmem_limit_bytes=vmem_limit_bytes),
    )(xk, w2, b2)

    # (N, Coutp, Ho*Wo) -> NCHW: just a channel slice (no-op when Cout % 8 == 0)
    # and a free reshape; no transpose, no padded-to-128 HBM round trip.
    return out[:, :Cout, :].reshape(N, Cout, Ho, Wo)


def _reference(x_nchw, conv_w, conv_b, gamma, beta, run_mean, run_var,
               *, stride=1, padding=1, eps=1e-5):
    y = jax.lax.conv_general_dilated(
        x_nchw, conv_w, window_strides=(stride, stride),
        padding=[(padding, padding), (padding, padding)],
        dimension_numbers=("NCHW", "OIHW", "NCHW"))
    y = y + conv_b[None, :, None, None]
    s = gamma / jnp.sqrt(run_var + eps)
    y = (y - run_mean[None, :, None, None]) * s[None, :, None, None] \
        + beta[None, :, None, None]
    return jnp.maximum(y, 0.0)


if __name__ == "__main__":
    # Small shapes consistent with BasicConv2d(in_channels=4, out_channels=8,
    # kernel_size=3, padding=1) on CIFAR-style inputs.
    N, Cin, H, W = 2, 4, 16, 16
    Cout, KH, KW = 8, 3, 3

    key = jax.random.PRNGKey(0)
    k_x, k_w, k_b, k_g, k_bt, k_m, k_v = jax.random.split(key, 7)

    x = jax.random.normal(k_x, (N, Cin, H, W), dtype=jnp.float32)
    conv_w = 0.1 * jax.random.normal(k_w, (Cout, Cin, KH, KW), dtype=jnp.float32)
    conv_b = 0.05 * jax.random.normal(k_b, (Cout,), dtype=jnp.float32)
    gamma = 1.0 + 0.1 * jax.random.normal(k_g, (Cout,), dtype=jnp.float32)
    beta = 0.1 * jax.random.normal(k_bt, (Cout,), dtype=jnp.float32)
    run_mean = 0.1 * jax.random.normal(k_m, (Cout,), dtype=jnp.float32)
    run_var = 1.0 + 0.1 * jnp.abs(jax.random.normal(k_v, (Cout,), dtype=jnp.float32))

    fwd = jax.jit(functools.partial(basic_conv2d_pallas, stride=1, padding=1))
    out = fwd(x, conv_w, conv_b, gamma, beta, run_mean, run_var)
    out = jax.block_until_ready(out)

    ref = _reference(x, conv_w, conv_b, gamma, beta, run_mean, run_var,
                     stride=1, padding=1)
    assert out.shape == (N, Cout, H, W)
    assert jnp.allclose(out, ref, atol=1e-4, rtol=1e-4), "mismatch vs reference"

    print("KERNEL_OK")
</pallas_src>

<mosaic_0001>
module attributes {stable_mosaic.version = 11 : i64} {
  func.func @kernel(%arg0: i32, %arg1: memref<1x4x16x16xf32, #tpu.memory_space<vmem>>, %arg2: memref<8x36xf32, #tpu.memory_space<vmem>>, %arg3: memref<8x1xf32, #tpu.memory_space<vmem>>, %arg4: memref<1x8x256xf32, #tpu.memory_space<vmem>>, %arg5: memref<4x18x18xf32, #tpu.memory_space<vmem>>, %arg6: memref<36x256xf32, #tpu.memory_space<vmem>>) attributes {dimension_semantics = [#tpu.dimension_semantics<parallel>], iteration_bounds = array<i64: 2>, scalar_prefetch = 0 : i64, scratch_operands = 2 : i64, tpu.core_type = #tpu.core_type<tc>, window_params = [{transform_indices = @transform_0, window_bounds = array<i64: 1, 4, 16, 16>}, {pipeline_mode = #tpu.pipeline_mode<synchronous>, transform_indices = @transform_1, window_bounds = array<i64: 8, 36>}, {pipeline_mode = #tpu.pipeline_mode<synchronous>, transform_indices = @transform_2, window_bounds = array<i64: 8, 1>}, {transform_indices = @transform_3, window_bounds = array<i64: 1, 8, 256>}]} {
    %cst = arith.constant 0.000000e+00 : f32
    %0 = vector.broadcast %cst : f32 to vector<4x18x18xf32>
    %c0 = arith.constant 0 : index
    %c0_0 = arith.constant 0 : index
    %c0_1 = arith.constant 0 : index
    %1 = vector.load %arg5[%c0, %c0_0, %c0_1] : memref<4x18x18xf32, #tpu.memory_space<vmem>>, vector<4x18x18xf32>
    tpu.vector_store %arg5[%c0, %c0_0, %c0_1], %0 {strides = array<i32>} : memref<4x18x18xf32, #tpu.memory_space<vmem>>, vector<4x18x18xf32>,
    %c0_2 = arith.constant 0 : index
    %c0_3 = arith.constant 0 : index
    %c0_4 = arith.constant 0 : index
    %c0_5 = arith.constant 0 : index
    %2 = vector.load %arg1[%c0_2, %c0_3, %c0_4, %c0_5] : memref<1x4x16x16xf32, #tpu.memory_space<vmem>>, vector<1x4x16x16xf32>
    %3 = vector.shape_cast %2 : vector<1x4x16x16xf32> to vector<4x16x16xf32>
    %c0_6 = arith.constant 0 : index
    %c1 = arith.constant 1 : index
    %c1_7 = arith.constant 1 : index
    %4 = vector.load %arg5[%c0_6, %c1, %c1_7] : memref<4x18x18xf32, #tpu.memory_space<vmem>>, vector<4x16x16xf32>
    tpu.vector_store %arg5[%c0_6, %c1, %c1_7], %3 {strides = array<i32>} : memref<4x18x18xf32, #tpu.memory_space<vmem>>, vector<4x16x16xf32>,
    %c0_8 = arith.constant 0 : index
    %c0_9 = arith.constant 0 : index
    %c0_10 = arith.constant 0 : index
    %5 = vector.load %arg5[%c0_8, %c0_9, %c0_10] : memref<4x18x18xf32, #tpu.memory_space<vmem>>, vector<4x16x16xf32>
    %6 = vector.shape_cast %5 : vector<4x16x16xf32> to vector<4x256xf32>
    %c0_11 = arith.constant 0 : index
    %c0_12 = arith.constant 0 : index
    %7 = vector.load %arg6[%c0_11, %c0_12] : memref<36x256xf32, #tpu.memory_space<vmem>>, vector<4x256xf32>
    tpu.vector_store %arg6[%c0_11, %c0_12], %6 {strides = array<i32>} : memref<36x256xf32, #tpu.memory_space<vmem>>, vector<4x256xf32>,
    %c0_13 = arith.constant 0 : index
    %c0_14 = arith.constant 0 : index
    %c1_15 = arith.constant 1 : index
    %8 = vector.load %arg5[%c0_13, %c0_14, %c1_15] : memref<4x18x18xf32, #tpu.memory_space<vmem>>, vector<4x16x16xf32>
    %9 = vector.shape_cast %8 : vector<4x16x16xf32> to vector<4x256xf32>
    %c4 = arith.constant 4 : index
    %c0_16 = arith.constant 0 : index
    %10 = vector.load %arg6[%c4, %c0_16] : memref<36x256xf32, #tpu.memory_space<vmem>>, vector<4x256xf32>
    tpu.vector_store %arg6[%c4, %c0_16], %9 {strides = array<i32>} : memref<36x256xf32, #tpu.memory_space<vmem>>, vector<4x256xf32>,
    %c0_17 = arith.constant 0 : index
    %c0_18 = arith.constant 0 : index
    %c2 = arith.constant 2 : index
    %11 = vector.load %arg5[%c0_17, %c0_18, %c2] : memref<4x18x18xf32, #tpu.memory_space<vmem>>, vector<4x16x16xf32>
    %12 = vector.shape_cast %11 : vector<4x16x16xf32> to vector<4x256xf32>
    %c8 = arith.constant 8 : index
    %c0_19 = arith.constant 0 : index
    %13 = vector.load %arg6[%c8, %c0_19] : memref<36x256xf32, #tpu.memory_space<vmem>>, vector<4x256xf32>
    tpu.vector_store %arg6[%c8, %c0_19], %12 {strides = array<i32>} : memref<36x256xf32, #tpu.memory_space<vmem>>, vector<4x256xf32>,
    %c0_20 = arith.constant 0 : index
    %c1_21 = arith.constant 1 : index
    %c0_22 = arith.constant 0 : index
    %14 = vector.load %arg5[%c0_20, %c1_21, %c0_22] : memref<4x18x18xf32, #tpu.memory_space<vmem>>, vector<4x16x16xf32>
    %15 = vector.shape_cast %14 : vector<4x16x16xf32> to vector<4x256xf32>
    %c12 = arith.constant 12 : index
    %c0_23 = arith.constant 0 : index
    %16 = vector.load %arg6[%c12, %c0_23] : memref<36x256xf32, #tpu.memory_space<vmem>>, vector<4x256xf32>
    tpu.vector_store %arg6[%c12, %c0_23], %15 {strides = array<i32>} : memref<36x256xf32, #tpu.memory_space<vmem>>, vector<4x256xf32>,
    %c0_24 = arith.constant 0 : index
    %c1_25 = arith.constant 1 : index
    %c1_26 = arith.constant 1 : index
    %17 = vector.load %arg5[%c0_24, %c1_25, %c1_26] : memref<4x18x18xf32, #tpu.memory_space<vmem>>, vector<4x16x16xf32>
    %18 = vector.shape_cast %17 : vector<4x16x16xf32> to vector<4x256xf32>
    %c16 = arith.constant 16 : index
    %c0_27 = arith.constant 0 : index
    %19 = vector.load %arg6[%c16, %c0_27] : memref<36x256xf32, #tpu.memory_space<vmem>>, vector<4x256xf32>
    tpu.vector_store %arg6[%c16, %c0_27], %18 {strides = array<i32>} : memref<36x256xf32, #tpu.memory_space<vmem>>, vector<4x256xf32>,
    %c0_28 = arith.constant 0 : index
    %c1_29 = arith.constant 1 : index
    %c2_30 = arith.constant 2 : index
    %20 = vector.load %arg5[%c0_28, %c1_29, %c2_30] : memref<4x18x18xf32, #tpu.memory_space<vmem>>, vector<4x16x16xf32>
    %21 = vector.shape_cast %20 : vector<4x16x16xf32> to vector<4x256xf32>
    %c20 = arith.constant 20 : index
    %c0_31 = arith.constant 0 : index
    %22 = vector.load %arg6[%c20, %c0_31] : memref<36x256xf32, #tpu.memory_space<vmem>>, vector<4x256xf32>
    tpu.vector_store %arg6[%c20, %c0_31], %21 {strides = array<i32>} : memref<36x256xf32, #tpu.memory_space<vmem>>, vector<4x256xf32>,
    %c0_32 = arith.constant 0 : index
    %c2_33 = arith.constant 2 : index
    %c0_34 = arith.constant 0 : index
    %23 = vector.load %arg5[%c0_32, %c2_33, %c0_34] : memref<4x18x18xf32, #tpu.memory_space<vmem>>, vector<4x16x16xf32>
    %24 = vector.shape_cast %23 : vector<4x16x16xf32> to vector<4x256xf32>
    %c24 = arith.constant 24 : index
    %c0_35 = arith.constant 0 : index
    %25 = vector.load %arg6[%c24, %c0_35] : memref<36x256xf32, #tpu.memory_space<vmem>>, vector<4x256xf32>
    tpu.vector_store %arg6[%c24, %c0_35], %24 {strides = array<i32>} : memref<36x256xf32, #tpu.memory_space<vmem>>, vector<4x256xf32>,
    %c0_36 = arith.constant 0 : index
    %c2_37 = arith.constant 2 : index
    %c1_38 = arith.constant 1 : index
    %26 = vector.load %arg5[%c0_36, %c2_37, %c1_38] : memref<4x18x18xf32, #tpu.memory_space<vmem>>, vector<4x16x16xf32>
    %27 = vector.shape_cast %26 : vector<4x16x16xf32> to vector<4x256xf32>
    %c28 = arith.constant 28 : index
    %c0_39 = arith.constant 0 : index
    %28 = vector.load %arg6[%c28, %c0_39] : memref<36x256xf32, #tpu.memory_space<vmem>>, vector<4x256xf32>
    tpu.vector_store %arg6[%c28, %c0_39], %27 {strides = array<i32>} : memref<36x256xf32, #tpu.memory_space<vmem>>, vector<4x256xf32>,
    %c0_40 = arith.constant 0 : index
    %c2_41 = arith.constant 2 : index
    %c2_42 = arith.constant 2 : index
    %29 = vector.load %arg5[%c0_40, %c2_41, %c2_42] : memref<4x18x18xf32, #tpu.memory_space<vmem>>, vector<4x16x16xf32>
    %30 = vector.shape_cast %29 : vector<4x16x16xf32> to vector<4x256xf32>
    %c32 = arith.constant 32 : index
    %c0_43 = arith.constant 0 : index
    %31 = vector.load %arg6[%c32, %c0_43] : memref<36x256xf32, #tpu.memory_space<vmem>>, vector<4x256xf32>
    tpu.vector_store %arg6[%c32, %c0_43], %30 {strides = array<i32>} : memref<36x256xf32, #tpu.memory_space<vmem>>, vector<4x256xf32>,
    %c0_44 = arith.constant 0 : index
    %c0_45 = arith.constant 0 : index
    %32 = vector.load %arg2[%c0_44, %c0_45] : memref<8x36xf32, #tpu.memory_space<vmem>>, vector<8x36xf32>
    %c0_46 = arith.constant 0 : index
    %c0_47 = arith.constant 0 : index
    %33 = vector.load %arg6[%c0_46, %c0_47] : memref<36x256xf32, #tpu.memory_space<vmem>>, vector<36x256xf32>
    %cst_48 = arith.constant dense<0.000000e+00> : vector<8x256xf32>
    %34 = tpu.matmul %32, %33, %cst_48 {dimension_numbers = #tpu.dot_dimension_numbers<[1], [0], [0], [1], [0, 0, 1, 1], [], []>} : vector<8x36xf32>, vector<36x256xf32>, vector<8x256xf32> -> vector<8x256xf32>
    %c0_49 = arith.constant 0 : index
    %c0_50 = arith.constant 0 : index
    %35 = vector.load %arg3[%c0_49, %c0_50] : memref<8x1xf32, #tpu.memory_space<vmem>>, vector<8x1xf32>
    %36 = vector.broadcast %35 : vector<8x1xf32> to vector<8x256xf32>
    %37 = arith.addf %34, %36 : vector<8x256xf32>
    %cst_51 = arith.constant 0.000000e+00 : f32
    %38 = vector.broadcast %cst_51 : f32 to vector<8x256xf32>
    %39 = arith.maximumf %37, %38 : vector<8x256xf32>
    %c0_52 = arith.constant 0 : index
    %c0_53 = arith.constant 0 : index
    %c0_54 = arith.constant 0 : index
    %40 = vector.load %arg4[%c0_52, %c0_53, %c0_54] : memref<1x8x256xf32, #tpu.memory_space<vmem>>, vector<1x8x256xf32>
    %41 = vector.shape_cast %40 : vector<1x8x256xf32> to vector<8x256xf32>
    %42 = vector.shape_cast %39 : vector<8x256xf32> to vector<1x8x256xf32>
    tpu.vector_store %arg4[%c0_52, %c0_53, %c0_54], %42 {strides = array<i32>} : memref<1x8x256xf32, #tpu.memory_space<vmem>>, vector<1x8x256xf32>,
    return
  }
  func.func @transform_0(%arg0: i32) -> (i32, i32, i32, i32) {
    %c0_i32 = arith.constant 0 : i32
    %c0_i32_0 = arith.constant 0 : i32
    %c0_i32_1 = arith.constant 0 : i32
    %c0_i32_2 = arith.constant 0 : i32
    return %arg0, %c0_i32, %c0_i32_0, %c0_i32_1 : i32, i32, i32, i32
  }
  func.func @transform_1(%arg0: i32) -> (i32, i32) {
    %c0_i32 = arith.constant 0 : i32
    %c0_i32_0 = arith.constant 0 : i32
    %c0_i32_1 = arith.constant 0 : i32
    return %c0_i32, %c0_i32_0 : i32, i32
  }
  func.func @transform_2(%arg0: i32) -> (i32, i32) {
    %c0_i32 = arith.constant 0 : i32
    %c0_i32_0 = arith.constant 0 : i32
    %c0_i32_1 = arith.constant 0 : i32
    return %c0_i32, %c0_i32_0 : i32, i32
  }
  func.func @transform_3(%arg0: i32) -> (i32, i32, i32) {
    %c0_i32 = arith.constant 0 : i32
    %c0_i32_0 = arith.constant 0 : i32
    %c0_i32_1 = arith.constant 0 : i32
    return %arg0, %c0_i32, %c0_i32_0 : i32, i32, i32
  }
}

</mosaic_0001>

<llo_original>
// kernel: basic_conv2d_pallas.1
$region0: #{basic_conv2d_pallas.1}
  #allocation0 [shape = 'u32[]', space=smem, size = 0x4, offset = 0x4, fixed_abs, tag = 'smem constant byte address 0x4 - core index']
  #allocation1 [shape = 'u32[144,128]{1,0:T(1,128)}', space=vmem, size = 0x12000, scoped, tag = 'internal scratch']
  #allocation2 [shape = 'f32[4,18,18]{2,1,0:T(8,128)}', space=vmem, size = 0xc000, scoped, tag = 'scratch operand']
  #allocation3 [shape = 'f32[36,256]{1,0:T(8,128)}', space=vmem, size = 0xa000, scoped, tag = 'scratch operand']
  %s0 = inlined_call_operand.vmem [shape: f32[2,4,16,16], index: 0, kind: input, shape index: {}]
  %s1 = inlined_call_operand.vmem [shape: f32[8,36], index: 1, kind: input, shape index: {}]
  %s2 = inlined_call_operand.vmem [shape: f32[8,1], index: 2, kind: input, shape index: {}]
  %s3 = inlined_call_operand.vmem [shape: f32[2,8,256], index: 3, kind: output, shape index: {}]
  %s4 = sld [smem:[#allocation0]]
  $region45: #{basic_conv2d_pallas.1} parent=0
    _
  %s6 = ssub.s32 1, %s4
  %s7 = scalar_select 0, %s6, %s4
  loop: start=0, step=1, limit=4
  $region2: #{basic_conv2d_pallas.1} parent=0 // loop_pre_header
    _
  $region3: #{basic_conv2d_pallas.1} parent=0 // loop_header
    %s9 = sphi 0, %s13
    %p10 = scmp.ge.s32.totalorder %s9, 4
    %s19 = sphi 0, %s21
    %s22 = sphi 0, %s19
    %s23 = sphi 0, %s22
    %s39 = sphi 0, %s23
    %s43 = sphi 0, %s43
    %s45 = sphi 0, %s43
    %s46 = sphi 0, %s45
    %s60 = sphi 0, %s46
    %s64 = sphi 0, %s64
    %s66 = sphi 0, %s64
    %s67 = sphi 0, %s66
    %s81 = sphi 0, %s67
    %s87 = sphi 0, %s89
    %s90 = sphi 0, %s87
    %s91 = sphi 0, %s90
    %s107 = sphi 0, %s91
  $region4: #{basic_conv2d_pallas.1} parent=0 // loop_header_branch
    %12 = sbr.rel (%p10) target = $region8
  $region5: #{basic_conv2d_pallas.1} parent=0 // loop_body
    %s14 = ssub.s32 %s9, 1
    %s15 = ssub.s32 %s9, 2
    %s16 = sadd.s32 %s9, 1
    %s17 = ssub.s32 %s9, %s16
    %p18 = scmp.eq.s32.totalorder %s17, 0
    %s20 = sadd.s32 %s19, 1
    %s21 = scalar_select %p18, %s19, %s20
    %p24 = pneg %p18
    %p25 = scmp.eq.s32.totalorder %s9, 1
    %p26 = por %p24, %p25
    %p27 = scmp.ne.s32.totalorder %s19, %s22
    %p28 = scmp.eq.s32.totalorder %s9, 0
    %p29 = por %p27, %p28
    %p30 = scmp.ne.s32.totalorder %s19, %s22
    %p31 = scmp.eq.s32.totalorder %s14, 1
    %p32 = por %p30, %p31
    %p33 = scmp.ne.s32.totalorder %s22, %s23
    %p34 = scmp.eq.s32.totalorder %s14, 0
    %p35 = por %p33, %p34
    %p36 = scmp.ne.s32.totalorder %s22, %s23
    %p37 = scmp.eq.s32.totalorder %s15, 1
    %p38 = por %p36, %p37
    %p40 = scmp.ne.s32.totalorder %s23, %s39
    %p41 = scmp.eq.s32.totalorder %s15, 0
    %p42 = por %p40, %p41
    %s44 = sadd.s32 %s43, 1
    %p47 = scmp.eq.s32.totalorder %s9, 1
    %p48 = scmp.ne.s32.totalorder %s43, %s45
    %p49 = scmp.eq.s32.totalorder %s9, 0
    %p50 = por %p48, %p49
    %p51 = scmp.ne.s32.totalorder %s43, %s45
    %p52 = scmp.eq.s32.totalorder %s14, 1
    %p53 = por %p51, %p52
    %p54 = scmp.ne.s32.totalorder %s45, %s46
    %p55 = scmp.eq.s32.totalorder %s14, 0
    %p56 = por %p54, %p55
    %p57 = scmp.ne.s32.totalorder %s45, %s46
    %p58 = scmp.eq.s32.totalorder %s15, 1
    %p59 = por %p57, %p58
    %p61 = scmp.ne.s32.totalorder %s46, %s60
    %p62 = scmp.eq.s32.totalorder %s15, 0
    %p63 = por %p61, %p62
    %s65 = sadd.s32 %s64, 1
    %p68 = scmp.eq.s32.totalorder %s9, 1
    %p69 = scmp.ne.s32.totalorder %s64, %s66
    %p70 = scmp.eq.s32.totalorder %s9, 0
    %p71 = por %p69, %p70
    %p72 = scmp.ne.s32.totalorder %s64, %s66
    %p73 = scmp.eq.s32.totalorder %s14, 1
    %p74 = por %p72, %p73
    %p75 = scmp.ne.s32.totalorder %s66, %s67
    %p76 = scmp.eq.s32.totalorder %s14, 0
    %p77 = por %p75, %p76
    %p78 = scmp.ne.s32.totalorder %s66, %s67
    %p79 = scmp.eq.s32.totalorder %s15, 1
    %p80 = por %p78, %p79
    %p82 = scmp.ne.s32.totalorder %s67, %s81
    %p83 = scmp.eq.s32.totalorder %s15, 0
    %p84 = por %p82, %p83
    %s85 = ssub.s32 %s9, %s16
    %p86 = scmp.eq.s32.totalorder %s85, 0
    %s88 = sadd.s32 %s87, 1
    %s89 = scalar_select %p86, %s87, %s88
    %p92 = pneg %p86
    %p93 = scmp.eq.s32.totalorder %s9, 1
    %p94 = por %p92, %p93
    %p95 = scmp.ne.s32.totalorder %s87, %s90
    %p96 = scmp.eq.s32.totalorder %s9, 0
    %p97 = por %p95, %p96
    %p98 = scmp.ne.s32.totalorder %s87, %s90
    %p99 = scmp.eq.s32.totalorder %s14, 1
    %p100 = por %p98, %p99
    %p101 = scmp.ne.s32.totalorder %s90, %s91
    %p102 = scmp.eq.s32.totalorder %s14, 0
    %p103 = por %p101, %p102
    %p104 = scmp.ne.s32.totalorder %s90, %s91
    %p105 = scmp.eq.s32.totalorder %s15, 1
    %p106 = por %p104, %p105
    %p108 = scmp.ne.s32.totalorder %s91, %s107
    %p109 = scmp.eq.s32.totalorder %s15, 0
    %p110 = por %p108, %p109
    %p111 = scmp.le.s32.totalorder 1, %s9
    %p112 = scmp.lt.s32.totalorder %s9, 3
    %p113 = pnand %p111, %p112
    %p114 = pneg %p113
    // Predicated region
    $region9: #{basic_conv2d_pallas.1} parent=5 // pred_check
      _
    $region10: #{basic_conv2d_pallas.1} parent=5 // pred_check_branch
      %116 = sbr.rel (%p113) target = $region12
    $region11: #{basic_conv2d_pallas.1} parent=5 // pred_region
      %s117 = ssub.s32 %s9, 1
      // Predicated region
      $region13: #{basic_conv2d_pallas.1} parent=11 // pred_check
        %p118 = pneg %p56
      $region14: #{basic_conv2d_pallas.1} parent=11 // pred_check_branch
        %120 = sbr.rel (%p118) target = $region16
      $region15: #{basic_conv2d_pallas.1} parent=11 // pred_region
        _
      $region16: #{basic_conv2d_pallas.1} parent=11 // pred_fallthru
        _
      // Predicated region
      $region17: #{basic_conv2d_pallas.1} parent=11 // pred_check
        %p121 = pneg %p77
      $region18: #{basic_conv2d_pallas.1} parent=11 // pred_check_branch
        %123 = sbr.rel (%p121) target = $region20
      $region19: #{basic_conv2d_pallas.1} parent=11 // pred_region
        _
      $region20: #{basic_conv2d_pallas.1} parent=11 // pred_fallthru
        _
    $region12: #{basic_conv2d_pallas.1} parent=5 // pred_fallthru
      _
    %p124 = scmp.lt.s32.totalorder %s9, 2
    // Predicated region
    $region21: #{basic_conv2d_pallas.1} parent=5 // pred_check
      %p125 = pneg %p124
    $region22: #{basic_conv2d_pallas.1} parent=5 // pred_check_branch
      %127 = sbr.rel (%p125) target = $region24
    $region23: #{basic_conv2d_pallas.1} parent=5 // pred_region
      // Predicated region
      $region25: #{basic_conv2d_pallas.1} parent=23 // pred_check
        %p128 = pneg %p29
      $region26: #{basic_conv2d_pallas.1} parent=23 // pred_check_branch
        %130 = sbr.rel (%p128) target = $region28
      $region27: #{basic_conv2d_pallas.1} parent=23 // pred_region
        %p131 = scmp.lt.s32.totalorder %s9, 1
        %s132 = scalar_select %p131, %s9, 1
        %s133 = smul.addr %s132, 8
        %s134 = smul.addr %s133, 8
        %s135 = scalar_lea.vmem %s0, %s134
      $region28: #{basic_conv2d_pallas.1} parent=23 // pred_fallthru
        _
    $region24: #{basic_conv2d_pallas.1} parent=5 // pred_fallthru
      _
    %p136 = scmp.le.s32.totalorder 1, %s9
    %p137 = scmp.lt.s32.totalorder %s9, 3
    %p138 = pnand %p136, %p137
    %p139 = pneg %p138
    // Predicated region
    $region29: #{basic_conv2d_pallas.1} parent=5 // pred_check
      _
    $region30: #{basic_conv2d_pallas.1} parent=5 // pred_check_branch
      %141 = sbr.rel (%p138) target = $region32
    $region31: #{basic_conv2d_pallas.1} parent=5 // pred_region
      %s142 = ssub.s32 %s9, 1
      %p143 = scmp.lt.s32.totalorder %s14, 1
      %s144 = scalar_select %p143, %s14, 1
      %s145 = smul.addr %s144, 8
      %s146 = smul.addr %s145, 8
      %s147 = scalar_lea.vmem %s0, %s146
      %p148 = pneg %p35
      %p149 = pneg %p32
      %p150 = pneg %p56
      %p151 = pneg %p53
      %p152 = pneg %p77
      %p153 = pneg %p74
      %p154 = pneg %p103
      %p155 = pneg %p100
      %p156 = scmp.lt.s32.totalorder %s14, 1
      %s157 = scalar_select %p156, %s14, 1
      %s158 = smul.addr %s157, 2
      %s159 = smul.addr %s158, 8
      %s160 = scalar_lea.vmem %s3, %s159
      %p161 = scmp.lt.s32.totalorder %s14, 1
      %s162 = scalar_select %p161, %s14, 1
      %s163 = smul.addr %s162, 8
      %s164 = smul.addr %s163, 8
      %s165 = scalar_lea.vmem %s0, %s164
      %p166 = scmp.lt.s32.totalorder %s14, 1
      %s167 = scalar_select %p166, %s14, 1
      %s168 = smul.addr %s167, 2
      %s169 = smul.addr %s168, 8
      %s170 = scalar_lea.vmem %s3, %s169
      %vm171 = vcmask 146432
      %172 = vst.msk [vmem:[#allocation2] sm:$0xff] %vm171, 0.0
      %173 = vst.msk [vmem:[#allocation2 + $0x8] sm:$0xff] %vm171, 0.0
      %vm174 = vcmask 140288
      %175 = vst.msk [vmem:[#allocation2 + $0x10] sm:$0x3] %vm174, 0.0
      %176 = vst.msk [vmem:[#allocation2 + $0x18] sm:$0xff] %vm171, 0.0
      %177 = vst.msk [vmem:[#allocation2 + $0x20] sm:$0xff] %vm171, 0.0
      %178 = vst.msk [vmem:[#allocation2 + $0x28] sm:$0x3] %vm174, 0.0
      %179 = vst.msk [vmem:[#allocation2 + $0x30] sm:$0xff] %vm171, 0.0
      %180 = vst.msk [vmem:[#allocation2 + $0x38] sm:$0xff] %vm171, 0.0
      %181 = vst.msk [vmem:[#allocation2 + $0x40] sm:$0x3] %vm174, 0.0
      %182 = vst.msk [vmem:[#allocation2 + $0x48] sm:$0xff] %vm171, 0.0
      %183 = vst.msk [vmem:[#allocation2 + $0x50] sm:$0xff] %vm171, 0.0
      %184 = vst.msk [vmem:[#allocation2 + $0x58] sm:$0x3] %vm174, 0.0
      %v185 = vld [vmem:[%s165] sm:$0xff]
      %v186 = vld [vmem:[%s165 + $0x8] sm:$0xff]
      %v187 = vld [vmem:[%s165 + $0x10] sm:$0xff]
      %v188 = vld [vmem:[%s165 + $0x18] sm:$0xff]
      %v189 = vld [vmem:[%s165 + $0x20] sm:$0xff]
      %v190 = vld [vmem:[%s165 + $0x28] sm:$0xff]
      %v191 = vld [vmem:[%s165 + $0x30] sm:$0xff]
      %v192 = vld [vmem:[%s165 + $0x38] sm:$0xff]
      %201 = vrot.lane.b32.xlu0 %v185, 1
      %v202 = vpop.permute.xlu0 %201
      %203 = vrot.lane.b32.xlu0 %v186, 1
      %v204 = vpop.permute.xlu0 %203
      %205 = vrot.lane.b32.xlu0 %v187, 1
      %v206 = vpop.permute.xlu0 %205
      %207 = vrot.lane.b32.xlu0 %v188, 1
      %v208 = vpop.permute.xlu0 %207
      %209 = vrot.lane.b32.xlu0 %v189, 1
      %v210 = vpop.permute.xlu0 %209
      %211 = vrot.lane.b32.xlu0 %v190, 1
      %v212 = vpop.permute.xlu0 %211
      %213 = vrot.lane.b32.xlu0 %v191, 1
      %v214 = vpop.permute.xlu0 %213
      %215 = vrot.lane.b32.xlu0 %v192, 1
      %v216 = vpop.permute.xlu0 %215
      %vm225 = vcmask 138248
      %226 = vst.msk [vmem:[#allocation2 + $0x1] sm:$0xff] %vm225, %v202
      %227 = vst.msk [vmem:[#allocation2 + $0x9] sm:$0xff] %vm225, %v204
      %228 = vst.msk [vmem:[#allocation2 + $0x19] sm:$0xff] %vm225, %v206
      %229 = vst.msk [vmem:[#allocation2 + $0x21] sm:$0xff] %vm225, %v208
      %230 = vst.msk [vmem:[#allocation2 + $0x31] sm:$0xff] %vm225, %v210
      %231 = vst.msk [vmem:[#allocation2 + $0x39] sm:$0xff] %vm225, %v212
      %232 = vst.msk [vmem:[#allocation2 + $0x49] sm:$0xff] %vm225, %v214
      %233 = vst.msk [vmem:[#allocation2 + $0x51] sm:$0xff] %vm225, %v216
      %v234 = vld [vmem:[#allocation2] sm:$0xff]
      %v235 = vld [vmem:[#allocation2 + $0x8] sm:$0xff]
      %v236 = vld [vmem:[#allocation2 + $0x18] sm:$0xff]
      %v237 = vld [vmem:[#allocation2 + $0x20] sm:$0xff]
      %v238 = vld [vmem:[#allocation2 + $0x30] sm:$0xff]
      %v239 = vld [vmem:[#allocation2 + $0x38] sm:$0xff]
      %v240 = vld [vmem:[#allocation2 + $0x48] sm:$0xff]
      %v241 = vld [vmem:[#allocation2 + $0x50] sm:$0xff]
      %v242 = vcombine.low %v234, %v238
      %v243 = vcombine.high %v234, %v238
      %v245 = vunpack.c.l.s4 1983009808
      %v246 = vunpack.c.0.s8 %v245
      %v247 = vlaneseq
      %v248 = vshrl.u32 %v247, 7
      %v249 = vsub.s32 %v246, %v248
      %v250 = vrot.slane %v242, %v249
      %v252 = vunpack.c.l.s4 1983009808
      %v253 = vunpack.c.0.s8 %v252
      %v254 = vlaneseq
      %v255 = vshrl.u32 %v254, 7
      %v256 = vsub.s32 %v253, %v255
      %v257 = vrot.slane %v243, %v256
      %v258 = vcombine.low %v236, %v240
      %v259 = vcombine.high %v236, %v240
      %v261 = vunpack.c.l.s4 1983009808
      %v262 = vunpack.c.0.s8 %v261
      %v263 = vlaneseq
      %v264 = vshrl.u32 %v263, 7
      %v265 = vsub.s32 %v262, %v264
      %v266 = vrot.slane %v258, %v265
      %v268 = vunpack.c.l.s4 1983009808
      %v269 = vunpack.c.0.s8 %v268
      %v270 = vlaneseq
      %v271 = vshrl.u32 %v270, 7
      %v272 = vsub.s32 %v269, %v271
      %v273 = vrot.slane %v259, %v272
      %v274 = vcombine.low %v250, %v266
      %v275 = vcombine.high %v250, %v266
      %v277 = vunpack.c.l.s4 1934713408
      %v278 = vunpack.c.0.s8 %v277
      %v279 = vlaneseq
      %v280 = vshrl.u32 %v279, 7
      %v281 = vsub.s32 %v278, %v280
      %v282 = vrot.slane %v274, %v281
      %v284 = vunpack.c.l.s4 1934713408
      %v285 = vunpack.c.0.s8 %v284
      %v286 = vlaneseq
      %v287 = vshrl.u32 %v286, 7
      %v288 = vsub.s32 %v285, %v287
      %v289 = vrot.slane %v275, %v288
      %v290 = vcombine.low %v257, %v273
      %v291 = vcombine.high %v257, %v273
      %v293 = vunpack.c.l.s4 1934713408
      %v294 = vunpack.c.0.s8 %v293
      %v295 = vlaneseq
      %v296 = vshrl.u32 %v295, 7
      %v297 = vsub.s32 %v294, %v296
      %v298 = vrot.slane %v290, %v297
      %v300 = vunpack.c.l.s4 1934713408
      %v301 = vunpack.c.0.s8 %v300
      %v302 = vlaneseq
      %v303 = vshrl.u32 %v302, 7
      %v304 = vsub.s32 %v301, %v303
      %v305 = vrot.slane %v291, %v304
      %v306 = vcombine.high %v282, 0.0
      %v307 = vcombine.high %v289, 0.0
      %v308 = vcombine.high %v298, 0.0
      %v309 = vcombine.high %v305, 0.0
      %v310 = vcombine.low %v235, %v239
      %v311 = vcombine.high %v235, %v239
      %v313 = vunpack.c.l.s4 1983009808
      %v314 = vunpack.c.0.s8 %v313
      %v315 = vlaneseq
      %v316 = vshrl.u32 %v315, 7
      %v317 = vsub.s32 %v314, %v316
      %v318 = vrot.slane %v310, %v317
      %v320 = vunpack.c.l.s4 1983009808
      %v321 = vunpack.c.0.s8 %v320
      %v322 = vlaneseq
      %v323 = vshrl.u32 %v322, 7
      %v324 = vsub.s32 %v321, %v323
      %v325 = vrot.slane %v311, %v324
      %v326 = vcombine.low %v237, %v241
      %v327 = vcombine.high %v237, %v241
      %v329 = vunpack.c.l.s4 1983009808
      %v330 = vunpack.c.0.s8 %v329
      %v331 = vlaneseq
      %v332 = vshrl.u32 %v331, 7
      %v333 = vsub.s32 %v330, %v332
      %v334 = vrot.slane %v326, %v333
      %v336 = vunpack.c.l.s4 1983009808
      %v337 = vunpack.c.0.s8 %v336
      %v338 = vlaneseq
      %v339 = vshrl.u32 %v338, 7
      %v340 = vsub.s32 %v337, %v339
      %v341 = vrot.slane %v327, %v340
      %v342 = vcombine.low %v318, %v334
      %v343 = vcombine.high %v318, %v334
      %v345 = vunpack.c.l.s4 1934713408
      %v346 = vunpack.c.0.s8 %v345
      %v347 = vlaneseq
      %v348 = vshrl.u32 %v347, 7
      %v349 = vsub.s32 %v346, %v348
      %v350 = vrot.slane %v342, %v349
      %v352 = vunpack.c.l.s4 1934713408
      %v353 = vunpack.c.0.s8 %v352
      %v354 = vlaneseq
      %v355 = vshrl.u32 %v354, 7
      %v356 = vsub.s32 %v353, %v355
      %v357 = vrot.slane %v343, %v356
      %v358 = vcombine.low %v325, %v341
      %v359 = vcombine.high %v325, %v341
      %v361 = vunpack.c.l.s4 1934713408
      %v362 = vunpack.c.0.s8 %v361
      %v363 = vlaneseq
      %v364 = vshrl.u32 %v363, 7
      %v365 = vsub.s32 %v362, %v364
      %v366 = vrot.slane %v358, %v365
      %v368 = vunpack.c.l.s4 1934713408
      %v369 = vunpack.c.0.s8 %v368
      %v370 = vlaneseq
      %v371 = vshrl.u32 %v370, 7
      %v372 = vsub.s32 %v369, %v371
      %v373 = vrot.slane %v359, %v372
      %v374 = vcombine.high %v350, 0.0
      %v375 = vcombine.high %v357, 0.0
      %v376 = vcombine.high %v366, 0.0
      %v377 = vcombine.high %v373, 0.0
      %379 = vrot.lane.b32.xlu0 %v306, 16
      %v380 = vpop.permute.xlu0 %379
      %383 = vrot.lane.b32.xlu0 %v289, 32
      %v384 = vpop.permute.xlu0 %383
      %387 = vrot.lane.b32.xlu0 %v307, 48
      %v388 = vpop.permute.xlu0 %387
      %391 = vrot.lane.b32.xlu0 %v298, 64
      %v392 = vpop.permute.xlu0 %391
      %395 = vrot.lane.b32.xlu0 %v308, 80
      %v396 = vpop.permute.xlu0 %395
      %399 = vrot.lane.b32.xlu0 %v305, 96
      %v400 = vpop.permute.xlu0 %399
      %403 = vrot.lane.b32.xlu0 %v309, 112
      %v404 = vpop.permute.xlu0 %403
      %407 = vrot.lane.b32.xlu0 %v374, 16
      %v408 = vpop.permute.xlu0 %407
      %411 = vrot.lane.b32.xlu0 %v357, 32
      %v412 = vpop.permute.xlu0 %411
      %415 = vrot.lane.b32.xlu0 %v375, 48
      %v416 = vpop.permute.xlu0 %415
      %419 = vrot.lane.b32.xlu0 %v366, 64
      %v420 = vpop.permute.xlu0 %419
      %423 = vrot.lane.b32.xlu0 %v376, 80
      %v424 = vpop.permute.xlu0 %423
      %427 = vrot.lane.b32.xlu0 %v373, 96
      %v428 = vpop.permute.xlu0 %427
      %431 = vrot.lane.b32.xlu0 %v377, 112
      %v432 = vpop.permute.xlu0 %431
      %vm434 = vcmask 130048
      %v435 = vsel %vm434, %v282, %v380
      %vm436 = vcmask 261120
      %v437 = vsel %vm436, %v435, %v384
      %vm438 = vcmask 392192
      %v439 = vsel %vm438, %v437, %v388
      %vm440 = vcmask 523264
      %v441 = vsel %vm440, %v439, %v392
      %vm442 = vcmask 654336
      %v443 = vsel %vm442, %v441, %v396
      %vm444 = vcmask 785408
      %v445 = vsel %vm444, %v443, %v400
      %vm446 = vcmask 916480
      %v447 = vsel %vm446, %v445, %v404
      %v448 = vsel %vm434, %v350, %v408
      %v449 = vsel %vm436, %v448, %v412
      %v450 = vsel %vm438, %v449, %v416
      %v451 = vsel %vm440, %v450, %v420
      %v452 = vsel %vm442, %v451, %v424
      %v453 = vsel %vm444, %v452, %v428
      %v454 = vsel %vm446, %v453, %v432
      %455 = vst [vmem:[#allocation3] sm:$0xf] %v447
      %456 = vst [vmem:[#allocation3 + $0x8] sm:$0xf] %v454
      %v457 = vld [vmem:[#allocation2] sm:$0xff]
      %v458 = vld [vmem:[#allocation2 + $0x8] sm:$0xff]
      %v459 = vld [vmem:[#allocation2 + $0x18] sm:$0xff]
      %v460 = vld [vmem:[#allocation2 + $0x20] sm:$0xff]
      %v461 = vld [vmem:[#allocation2 + $0x30] sm:$0xff]
      %v462 = vld [vmem:[#allocation2 + $0x38] sm:$0xff]
      %v463 = vld [vmem:[#allocation2 + $0x48] sm:$0xff]
      %v464 = vld [vmem:[#allocation2 + $0x50] sm:$0xff]
      %473 = vrot.lane.b32.xlu0 %v457, 127
      %v474 = vpop.permute.xlu0 %473
      %475 = vrot.lane.b32.xlu0 %v458, 127
      %v476 = vpop.permute.xlu0 %475
      %477 = vrot.lane.b32.xlu0 %v459, 127
      %v478 = vpop.permute.xlu0 %477
      %479 = vrot.lane.b32.xlu0 %v460, 127
      %v480 = vpop.permute.xlu0 %479
      %481 = vrot.lane.b32.xlu0 %v461, 127
      %v482 = vpop.permute.xlu0 %481
      %483 = vrot.lane.b32.xlu0 %v462, 127
      %v484 = vpop.permute.xlu0 %483
      %485 = vrot.lane.b32.xlu0 %v463, 127
      %v486 = vpop.permute.xlu0 %485
      %487 = vrot.lane.b32.xlu0 %v464, 127
      %v488 = vpop.permute.xlu0 %487
      %v497 = vcombine.low %v474, %v482
      %v498 = vcombine.high %v474, %v482
      %v500 = vunpack.c.l.s4 1983009808
      %v501 = vunpack.c.0.s8 %v500
      %v502 = vlaneseq
      %v503 = vshrl.u32 %v502, 7
      %v504 = vsub.s32 %v501, %v503
      %v505 = vrot.slane %v497, %v504
      %v507 = vunpack.c.l.s4 1983009808
      %v508 = vunpack.c.0.s8 %v507
      %v509 = vlaneseq
      %v510 = vshrl.u32 %v509, 7
      %v511 = vsub.s32 %v508, %v510
      %v512 = vrot.slane %v498, %v511
      %v513 = vcombine.low %v478, %v486
      %v514 = vcombine.high %v478, %v486
      %v516 = vunpack.c.l.s4 1983009808
      %v517 = vunpack.c.0.s8 %v516
      %v518 = vlaneseq
      %v519 = vshrl.u32 %v518, 7
      %v520 = vsub.s32 %v517, %v519
      %v521 = vrot.slane %v513, %v520
      %v523 = vunpack.c.l.s4 1983009808
      %v524 = vunpack.c.0.s8 %v523
      %v525 = vlaneseq
      %v526 = vshrl.u32 %v525, 7
      %v527 = vsub.s32 %v524, %v526
      %v528 = vrot.slane %v514, %v527
      %v529 = vcombine.low %v505, %v521
      %v530 = vcombine.high %v505, %v521
      %v532 = vunpack.c.l.s4 1934713408
      %v533 = vunpack.c.0.s8 %v532
      %v534 = vlaneseq
      %v535 = vshrl.u32 %v534, 7
      %v536 = vsub.s32 %v533, %v535
      %v537 = vrot.slane %v529, %v536
      %v539 = vunpack.c.l.s4 1934713408
      %v540 = vunpack.c.0.s8 %v539
      %v541 = vlaneseq
      %v542 = vshrl.u32 %v541, 7
      %v543 = vsub.s32 %v540, %v542
      %v544 = vrot.slane %v530, %v543
      %v545 = vcombine.low %v512, %v528
      %v546 = vcombine.high %v512, %v528
      %v548 = vunpack.c.l.s4 1934713408
      %v549 = vunpack.c.0.s8 %v548
      %v550 = vlaneseq
      %v551 = vshrl.u32 %v550, 7
      %v552 = vsub.s32 %v549, %v551
      %v553 = vrot.slane %v545, %v552
      %v555 = vunpack.c.l.s4 1934713408
      %v556 = vunpack.c.0.s8 %v555
      %v557 = vlaneseq
      %v558 = vshrl.u32 %v557, 7
      %v559 = vsub.s32 %v556, %v558
      %v560 = vrot.slane %v546, %v559
      %v561 = vcombine.high %v537, 0.0
      %v562 = vcombine.high %v544, 0.0
      %v563 = vcombine.high %v553, 0.0
      %v564 = vcombine.high %v560, 0.0
      %v565 = vcombine.low %v476, %v484
      %v566 = vcombine.high %v476, %v484
      %v568 = vunpack.c.l.s4 1983009808
      %v569 = vunpack.c.0.s8 %v568
      %v570 = vlaneseq
      %v571 = vshrl.u32 %v570, 7
      %v572 = vsub.s32 %v569, %v571
      %v573 = vrot.slane %v565, %v572
      %v575 = vunpack.c.l.s4 1983009808
      %v576 = vunpack.c.0.s8 %v575
      %v577 = vlaneseq
      %v578 = vshrl.u32 %v577, 7
      %v579 = vsub.s32 %v576, %v578
      %v580 = vrot.slane %v566, %v579
      %v581 = vcombine.low %v480, %v488
      %v582 = vcombine.high %v480, %v488
      %v584 = vunpack.c.l.s4 1983009808
      %v585 = vunpack.c.0.s8 %v584
      %v586 = vlaneseq
      %v587 = vshrl.u32 %v586, 7
      %v588 = vsub.s32 %v585, %v587
      %v589 = vrot.slane %v581, %v588
      %v591 = vunpack.c.l.s4 1983009808
      %v592 = vunpack.c.0.s8 %v591
      %v593 = vlaneseq
      %v594 = vshrl.u32 %v593, 7
      %v595 = vsub.s32 %v592, %v594
      %v596 = vrot.slane %v582, %v595
      %v597 = vcombine.low %v573, %v589
      %v598 = vcombine.high %v573, %v589
      %v600 = vunpack.c.l.s4 1934713408
      %v601 = vunpack.c.0.s8 %v600
      %v602 = vlaneseq
      %v603 = vshrl.u32 %v602, 7
      %v604 = vsub.s32 %v601, %v603
      %v605 = vrot.slane %v597, %v604
      %v607 = vunpack.c.l.s4 1934713408
      %v608 = vunpack.c.0.s8 %v607
      %v609 = vlaneseq
      %v610 = vshrl.u32 %v609, 7
      %v611 = vsub.s32 %v608, %v610
      %v612 = vrot.slane %v598, %v611
      %v613 = vcombine.low %v580, %v596
      %v614 = vcombine.high %v580, %v596
      %v616 = vunpack.c.l.s4 1934713408
      %v617 = vunpack.c.0.s8 %v616
      %v618 = vlaneseq
      %v619 = vshrl.u32 %v618, 7
      %v620 = vsub.s32 %v617, %v619
      %v621 = vrot.slane %v613, %v620
      %v623 = vunpack.c.l.s4 1934713408
      %v624 = vunpack.c.0.s8 %v623
      %v625 = vlaneseq
      %v626 = vshrl.u32 %v625, 7
      %v627 = vsub.s32 %v624, %v626
      %v628 = vrot.slane %v614, %v627
      %v629 = vcombine.high %v605, 0.0
      %v630 = vcombine.high %v612, 0.0
      %v631 = vcombine.high %v621, 0.0
      %v632 = vcombine.high %v628, 0.0
      %634 = vrot.lane.b32.xlu0 %v561, 16
      %v635 = vpop.permute.xlu0 %634
      %638 = vrot.lane.b32.xlu0 %v544, 32
      %v639 = vpop.permute.xlu0 %638
      %642 = vrot.lane.b32.xlu0 %v562, 48
      %v643 = vpop.permute.xlu0 %642
      %646 = vrot.lane.b32.xlu0 %v553, 64
      %v647 = vpop.permute.xlu0 %646
      %650 = vrot.lane.b32.xlu0 %v563, 80
      %v651 = vpop.permute.xlu0 %650
      %654 = vrot.lane.b32.xlu0 %v560, 96
      %v655 = vpop.permute.xlu0 %654
      %658 = vrot.lane.b32.xlu0 %v564, 112
      %v659 = vpop.permute.xlu0 %658
      %662 = vrot.lane.b32.xlu0 %v629, 16
      %v663 = vpop.permute.xlu0 %662
      %666 = vrot.lane.b32.xlu0 %v612, 32
      %v667 = vpop.permute.xlu0 %666
      %670 = vrot.lane.b32.xlu0 %v630, 48
      %v671 = vpop.permute.xlu0 %670
      %674 = vrot.lane.b32.xlu0 %v621, 64
      %v675 = vpop.permute.xlu0 %674
      %678 = vrot.lane.b32.xlu0 %v631, 80
      %v679 = vpop.permute.xlu0 %678
      %682 = vrot.lane.b32.xlu0 %v628, 96
      %v683 = vpop.permute.xlu0 %682
      %686 = vrot.lane.b32.xlu0 %v632, 112
      %v687 = vpop.permute.xlu0 %686
      %v689 = vsel %vm434, %v537, %v635
      %v690 = vsel %vm436, %v689, %v639
      %v691 = vsel %vm438, %v690, %v643
      %v692 = vsel %vm440, %v691, %v647
      %v693 = vsel %vm442, %v692, %v651
      %v694 = vsel %vm444, %v693, %v655
      %v695 = vsel %vm446, %v694, %v659
      %v696 = vsel %vm434, %v605, %v663
      %v697 = vsel %vm436, %v696, %v667
      %v698 = vsel %vm438, %v697, %v671
      %v699 = vsel %vm440, %v698, %v675
      %v700 = vsel %vm442, %v699, %v679
      %v701 = vsel %vm444, %v700, %v683
      %v702 = vsel %vm446, %v701, %v687
      %v705 = vrot.slane %v695, 4
      %v706 = vrot.slane %v702, 4
      %709 = vst [vmem:[#allocation3] sm:$0xf0] %v705
      %710 = vst [vmem:[#allocation3 + $0x8] sm:$0xf0] %v706
      %v711 = vld [vmem:[#allocation2] sm:$0xff]
      %v712 = vld [vmem:[#allocation2 + $0x8] sm:$0xff]
      %v713 = vld [vmem:[#allocation2 + $0x18] sm:$0xff]
      %v714 = vld [vmem:[#allocation2 + $0x20] sm:$0xff]
      %v715 = vld [vmem:[#allocation2 + $0x30] sm:$0xff]
      %v716 = vld [vmem:[#allocation2 + $0x38] sm:$0xff]
      %v717 = vld [vmem:[#allocation2 + $0x48] sm:$0xff]
      %v718 = vld [vmem:[#allocation2 + $0x50] sm:$0xff]
      %727 = vrot.lane.b32.xlu0 %v711, 126
      %v728 = vpop.permute.xlu0 %727
      %729 = vrot.lane.b32.xlu0 %v712, 126
      %v730 = vpop.permute.xlu0 %729
      %731 = vrot.lane.b32.xlu0 %v713, 126
      %v732 = vpop.permute.xlu0 %731
      %733 = vrot.lane.b32.xlu0 %v714, 126
      %v734 = vpop.permute.xlu0 %733
      %735 = vrot.lane.b32.xlu0 %v715, 126
      %v736 = vpop.permute.xlu0 %735
      %737 = vrot.lane.b32.xlu0 %v716, 126
      %v738 = vpop.permute.xlu0 %737
      %739 = vrot.lane.b32.xlu0 %v717, 126
      %v740 = vpop.permute.xlu0 %739
      %741 = vrot.lane.b32.xlu0 %v718, 126
      %v742 = vpop.permute.xlu0 %741
      %v751 = vcombine.low %v728, %v736
      %v752 = vcombine.high %v728, %v736
      %v754 = vunpack.c.l.s4 1983009808
      %v755 = vunpack.c.0.s8 %v754
      %v756 = vlaneseq
      %v757 = vshrl.u32 %v756, 7
      %v758 = vsub.s32 %v755, %v757
      %v759 = vrot.slane %v751, %v758
      %v761 = vunpack.c.l.s4 1983009808
      %v762 = vunpack.c.0.s8 %v761
      %v763 = vlaneseq
      %v764 = vshrl.u32 %v763, 7
      %v765 = vsub.s32 %v762, %v764
      %v766 = vrot.slane %v752, %v765
      %v767 = vcombine.low %v732, %v740
      %v768 = vcombine.high %v732, %v740
      %v770 = vunpack.c.l.s4 1983009808
      %v771 = vunpack.c.0.s8 %v770
      %v772 = vlaneseq
      %v773 = vshrl.u32 %v772, 7
      %v774 = vsub.s32 %v771, %v773
      %v775 = vrot.slane %v767, %v774
      %v777 = vunpack.c.l.s4 1983009808
      %v778 = vunpack.c.0.s8 %v777
      %v779 = vlaneseq
      %v780 = vshrl.u32 %v779, 7
      %v781 = vsub.s32 %v778, %v780
      %v782 = vrot.slane %v768, %v781
      %v783 = vcombine.low %v759, %v775
      %v784 = vcombine.high %v759, %v775
      %v786 = vunpack.c.l.s4 1934713408
      %v787 = vunpack.c.0.s8 %v786
      %v788 = vlaneseq
      %v789 = vshrl.u32 %v788, 7
      %v790 = vsub.s32 %v787, %v789
      %v791 = vrot.slane %v783, %v790
      %v793 = vunpack.c.l.s4 1934713408
      %v794 = vunpack.c.0.s8 %v793
      %v795 = vlaneseq
      %v796 = vshrl.u32 %v795, 7
      %v797 = vsub.s32 %v794, %v796
      %v798 = vrot.slane %v784, %v797
      %v799 = vcombine.low %v766, %v782
      %v800 = vcombine.high %v766, %v782
      %v802 = vunpack.c.l.s4 1934713408
      %v803 = vunpack.c.0.s8 %v802
      %v804 = vlaneseq
      %v805 = vshrl.u32 %v804, 7
      %v806 = vsub.s32 %v803, %v805
      %v807 = vrot.slane %v799, %v806
      %v809 = vunpack.c.l.s4 1934713408
      %v810 = vunpack.c.0.s8 %v809
      %v811 = vlaneseq
      %v812 = vshrl.u32 %v811, 7
      %v813 = vsub.s32 %v810, %v812
      %v814 = vrot.slane %v800, %v813
      %v815 = vcombine.high %v791, 0.0
      %v816 = vcombine.high %v798, 0.0
      %v817 = vcombine.high %v807, 0.0
      %v818 = vcombine.high %v814, 0.0
      %v819 = vcombine.low %v730, %v738
      %v820 = vcombine.high %v730, %v738
      %v822 = vunpack.c.l.s4 1983009808
      %v823 = vunpack.c.0.s8 %v822
      %v824 = vlaneseq
      %v825 = vshrl.u32 %v824, 7
      %v826 = vsub.s32 %v823, %v825
      %v827 = vrot.slane %v819, %v826
      %v829 = vunpack.c.l.s4 1983009808
      %v830 = vunpack.c.0.s8 %v829
      %v831 = vlaneseq
      %v832 = vshrl.u32 %v831, 7
      %v833 = vsub.s32 %v830, %v832
      %v834 = vrot.slane %v820, %v833
      %v835 = vcombine.low %v734, %v742
      %v836 = vcombine.high %v734, %v742
      %v838 = vunpack.c.l.s4 1983009808
      %v839 = vunpack.c.0.s8 %v838
      %v840 = vlaneseq
      %v841 = vshrl.u32 %v840, 7
      %v842 = vsub.s32 %v839, %v841
      %v843 = vrot.slane %v835, %v842
      %v845 = vunpack.c.l.s4 1983009808
      %v846 = vunpack.c.0.s8 %v845
      %v847 = vlaneseq
      %v848 = vshrl.u32 %v847, 7
      %v849 = vsub.s32 %v846, %v848
      %v850 = vrot.slane %v836, %v849
      %v851 = vcombine.low %v827, %v843
      %v852 = vcombine.high %v827, %v843
      %v854 = vunpack.c.l.s4 1934713408
      %v855 = vunpack.c.0.s8 %v854
      %v856 = vlaneseq
      %v857 = vshrl.u32 %v856, 7
      %v858 = vsub.s32 %v855, %v857
      %v859 = vrot.slane %v851, %v858
      %v861 = vunpack.c.l.s4 1934713408
      %v862 = vunpack.c.0.s8 %v861
      %v863 = vlaneseq
      %v864 = vshrl.u32 %v863, 7
      %v865 = vsub.s32 %v862, %v864
      %v866 = vrot.slane %v852, %v865
      %v867 = vcombine.low %v834, %v850
      %v868 = vcombine.high %v834, %v850
      %v870 = vunpack.c.l.s4 1934713408
      %v871 = vunpack.c.0.s8 %v870
      %v872 = vlaneseq
      %v873 = vshrl.u32 %v872, 7
      %v874 = vsub.s32 %v871, %v873
      %v875 = vrot.slane %v867, %v874
      %v877 = vunpack.c.l.s4 1934713408
      %v878 = vunpack.c.0.s8 %v877
      %v879 = vlaneseq
      %v880 = vshrl.u32 %v879, 7
      %v881 = vsub.s32 %v878, %v880
      %v882 = vrot.slane %v868, %v881
      %v883 = vcombine.high %v859, 0.0
      %v884 = vcombine.high %v866, 0.0
      %v885 = vcombine.high %v875, 0.0
      %v886 = vcombine.high %v882, 0.0
      %888 = vrot.lane.b32.xlu0 %v815, 16
      %v889 = vpop.permute.xlu0 %888
      %892 = vrot.lane.b32.xlu0 %v798, 32
      %v893 = vpop.permute.xlu0 %892
      %896 = vrot.lane.b32.xlu0 %v816, 48
      %v897 = vpop.permute.xlu0 %896
      %900 = vrot.lane.b32.xlu0 %v807, 64
      %v901 = vpop.permute.xlu0 %900
      %904 = vrot.lane.b32.xlu0 %v817, 80
      %v905 = vpop.permute.xlu0 %904
      %908 = vrot.lane.b32.xlu0 %v814, 96
      %v909 = vpop.permute.xlu0 %908
      %912 = vrot.lane.b32.xlu0 %v818, 112
      %v913 = vpop.permute.xlu0 %912
      %916 = vrot.lane.b32.xlu0 %v883, 16
      %v917 = vpop.permute.xlu0 %916
      %920 = vrot.lane.b32.xlu0 %v866, 32
      %v921 = vpop.permute.xlu0 %920
      %924 = vrot.lane.b32.xlu0 %v884, 48
      %v925 = vpop.permute.xlu0 %924
      %928 = vrot.lane.b32.xlu0 %v875, 64
      %v929 = vpop.permute.xlu0 %928
      %932 = vrot.lane.b32.xlu0 %v885, 80
      %v933 = vpop.permute.xlu0 %932
      %936 = vrot.lane.b32.xlu0 %v882, 96
      %v937 = vpop.permute.xlu0 %936
      %940 = vrot.lane.b32.xlu0 %v886, 112
      %v941 = vpop.permute.xlu0 %940
      %v943 = vsel %vm434, %v791, %v889
      %v944 = vsel %vm436, %v943, %v893
      %v945 = vsel %vm438, %v944, %v897
      %v946 = vsel %vm440, %v945, %v901
      %v947 = vsel %vm442, %v946, %v905
      %v948 = vsel %vm444, %v947, %v909
      %v949 = vsel %vm446, %v948, %v913
      %v950 = vsel %vm434, %v859, %v917
      %v951 = vsel %vm436, %v950, %v921
      %v952 = vsel %vm438, %v951, %v925
      %v953 = vsel %vm440, %v952, %v929
      %v954 = vsel %vm442, %v953, %v933
      %v955 = vsel %vm444, %v954, %v937
      %v956 = vsel %vm446, %v955, %v941
      %957 = vst [vmem:[#allocation3 + $0x10] sm:$0xf] %v949
      %958 = vst [vmem:[#allocation3 + $0x18] sm:$0xf] %v956
      %v959 = vld [vmem:[#allocation2 + $0x1] sm:$0xff]
      %v960 = vld [vmem:[#allocation2 + $0x9] sm:$0xff]
      %v961 = vld [vmem:[#allocation2 + $0x19] sm:$0xff]
      %v962 = vld [vmem:[#allocation2 + $0x21] sm:$0xff]
      %v963 = vld [vmem:[#allocation2 + $0x31] sm:$0xff]
      %v964 = vld [vmem:[#allocation2 + $0x39] sm:$0xff]
      %v965 = vld [vmem:[#allocation2 + $0x49] sm:$0xff]
      %v966 = vld [vmem:[#allocation2 + $0x51] sm:$0xff]
      %v967 = vcombine.low %v959, %v963
      %v968 = vcombine.high %v959, %v963
      %v970 = vunpack.c.l.s4 1983009808
      %v971 = vunpack.c.0.s8 %v970
      %v972 = vlaneseq
      %v973 = vshrl.u32 %v972, 7
      %v974 = vsub.s32 %v971, %v973
      %v975 = vrot.slane %v967, %v974
      %v977 = vunpack.c.l.s4 1983009808
      %v978 = vunpack.c.0.s8 %v977
      %v979 = vlaneseq
      %v980 = vshrl.u32 %v979, 7
      %v981 = vsub.s32 %v978, %v980
      %v982 = vrot.slane %v968, %v981
      %v983 = vcombine.low %v961, %v965
      %v984 = vcombine.high %v961, %v965
      %v986 = vunpack.c.l.s4 1983009808
      %v987 = vunpack.c.0.s8 %v986
      %v988 = vlaneseq
      %v989 = vshrl.u32 %v988, 7
      %v990 = vsub.s32 %v987, %v989
      %v991 = vrot.slane %v983, %v990
      %v993 = vunpack.c.l.s4 1983009808
      %v994 = vunpack.c.0.s8 %v993
      %v995 = vlaneseq
      %v996 = vshrl.u32 %v995, 7
      %v997 = vsub.s32 %v994, %v996
      %v998 = vrot.slane %v984, %v997
      %v999 = vcombine.low %v975, %v991
      %v1000 = vcombine.high %v975, %v991
      %v1002 = vunpack.c.l.s4 1934713408
      %v1003 = vunpack.c.0.s8 %v1002
      %v1004 = vlaneseq
      %v1005 = vshrl.u32 %v1004, 7
      %v1006 = vsub.s32 %v1003, %v1005
      %v1007 = vrot.slane %v999, %v1006
      %v1009 = vunpack.c.l.s4 1934713408
      %v1010 = vunpack.c.0.s8 %v1009
      %v1011 = vlaneseq
      %v1012 = vshrl.u32 %v1011, 7
      %v1013 = vsub.s32 %v1010, %v1012
      %v1014 = vrot.slane %v1000, %v1013
      %v1015 = vcombine.low %v982, %v998
      %v1016 = vcombine.high %v982, %v998
      %v1018 = vunpack.c.l.s4 1934713408
      %v1019 = vunpack.c.0.s8 %v1018
      %v1020 = vlaneseq
      %v1021 = vshrl.u32 %v1020, 7
      %v1022 = vsub.s32 %v1019, %v1021
      %v1023 = vrot.slane %v1015, %v1022
      %v1025 = vunpack.c.l.s4 1934713408
      %v1026 = vunpack.c.0.s8 %v1025
      %v1027 = vlaneseq
      %v1028 = vshrl.u32 %v1027, 7
      %v1029 = vsub.s32 %v1026, %v1028
      %v1030 = vrot.slane %v1016, %v1029
      %v1031 = vcombine.high %v1007, 0.0
      %v1032 = vcombine.high %v1014, 0.0
      %v1033 = vcombine.high %v1023, 0.0
      %v1034 = vcombine.high %v1030, 0.0
      %v1035 = vcombine.low %v960, %v964
      %v1036 = vcombine.high %v960, %v964
      %v1038 = vunpack.c.l.s4 1983009808
      %v1039 = vunpack.c.0.s8 %v1038
      %v1040 = vlaneseq
      %v1041 = vshrl.u32 %v1040, 7
      %v1042 = vsub.s32 %v1039, %v1041
      %v1043 = vrot.slane %v1035, %v1042
      %v1045 = vunpack.c.l.s4 1983009808
      %v1046 = vunpack.c.0.s8 %v1045
      %v1047 = vlaneseq
      %v1048 = vshrl.u32 %v1047, 7
      %v1049 = vsub.s32 %v1046, %v1048
      %v1050 = vrot.slane %v1036, %v1049
      %v1051 = vcombine.low %v962, %v966
      %v1052 = vcombine.high %v962, %v966
      %v1054 = vunpack.c.l.s4 1983009808
      %v1055 = vunpack.c.0.s8 %v1054
      %v1056 = vlaneseq
      %v1057 = vshrl.u32 %v1056, 7
      %v1058 = vsub.s32 %v1055, %v1057
      %v1059 = vrot.slane %v1051, %v1058
      %v1061 = vunpack.c.l.s4 1983009808
      %v1062 = vunpack.c.0.s8 %v1061
      %v1063 = vlaneseq
      %v1064 = vshrl.u32 %v1063, 7
      %v1065 = vsub.s32 %v1062, %v1064
      %v1066 = vrot.slane %v1052, %v1065
      %v1067 = vcombine.low %v1043, %v1059
      %v1068 = vcombine.high %v1043, %v1059
      %v1070 = vunpack.c.l.s4 1934713408
      %v1071 = vunpack.c.0.s8 %v1070
      %v1072 = vlaneseq
      %v1073 = vshrl.u32 %v1072, 7
      %v1074 = vsub.s32 %v1071, %v1073
      %v1075 = vrot.slane %v1067, %v1074
      %v1077 = vunpack.c.l.s4 1934713408
      %v1078 = vunpack.c.0.s8 %v1077
      %v1079 = vlaneseq
      %v1080 = vshrl.u32 %v1079, 7
      %v1081 = vsub.s32 %v1078, %v1080
      %v1082 = vrot.slane %v1068, %v1081
      %v1083 = vcombine.low %v1050, %v1066
      %v1084 = vcombine.high %v1050, %v1066
      %v1086 = vunpack.c.l.s4 1934713408
      %v1087 = vunpack.c.0.s8 %v1086
      %v1088 = vlaneseq
      %v1089 = vshrl.u32 %v1088, 7
      %v1090 = vsub.s32 %v1087, %v1089
      %v1091 = vrot.slane %v1083, %v1090
      %v1093 = vunpack.c.l.s4 1934713408
      %v1094 = vunpack.c.0.s8 %v1093
      %v1095 = vlaneseq
      %v1096 = vshrl.u32 %v1095, 7
      %v1097 = vsub.s32 %v1094, %v1096
      %v1098 = vrot.slane %v1084, %v1097
      %v1099 = vcombine.high %v1075, 0.0
      %v1100 = vcombine.high %v1082, 0.0
      %v1101 = vcombine.high %v1091, 0.0
      %v1102 = vcombine.high %v1098, 0.0
      %1104 = vrot.lane.b32.xlu0 %v1031, 16
      %v1105 = vpop.permute.xlu0 %1104
      %1108 = vrot.lane.b32.xlu0 %v1014, 32
      %v1109 = vpop.permute.xlu0 %1108
      %1112 = vrot.lane.b32.xlu0 %v1032, 48
      %v1113 = vpop.permute.xlu0 %1112
      %1116 = vrot.lane.b32.xlu0 %v1023, 64
      %v1117 = vpop.permute.xlu0 %1116
      %1120 = vrot.lane.b32.xlu0 %v1033, 80
      %v1121 = vpop.permute.xlu0 %1120
      %1124 = vrot.lane.b32.xlu0 %v1030, 96
      %v1125 = vpop.permute.xlu0 %1124
      %1128 = vrot.lane.b32.xlu0 %v1034, 112
      %v1129 = vpop.permute.xlu0 %1128
      %1132 = vrot.lane.b32.xlu0 %v1099, 16
      %v1133 = vpop.permute.xlu0 %1132
      %1136 = vrot.lane.b32.xlu0 %v1082, 32
      %v1137 = vpop.permute.xlu0 %1136
      %1140 = vrot.lane.b32.xlu0 %v1100, 48
      %v1141 = vpop.permute.xlu0 %1140
      %1144 = vrot.lane.b32.xlu0 %v1091, 64
      %v1145 = vpop.permute.xlu0 %1144
      %1148 = vrot.lane.b32.xlu0 %v1101, 80
      %v1149 = vpop.permute.xlu0 %1148
      %1152 = vrot.lane.b32.xlu0 %v1098, 96
      %v1153 = vpop.permute.xlu0 %1152
      %1156 = vrot.lane.b32.xlu0 %v1102, 112
      %v1157 = vpop.permute.xlu0 %1156
      %v1159 = vsel %vm434, %v1007, %v1105
      %v1160 = vsel %vm436, %v1159, %v1109
      %v1161 = vsel %vm438, %v1160, %v1113
      %v1162 = vsel %vm440, %v1161, %v1117
      %v1163 = vsel %vm442, %v1162, %v1121
      %v1164 = vsel %vm444, %v1163, %v1125
      %v1165 = vsel %vm446, %v1164, %v1129
      %v1166 = vsel %vm434, %v1075, %v1133
      %v1167 = vsel %vm436, %v1166, %v1137
      %v1168 = vsel %vm438, %v1167, %v1141
      %v1169 = vsel %vm440, %v1168, %v1145
      %v1170 = vsel %vm442, %v1169, %v1149
      %v1171 = vsel %vm444, %v1170, %v1153
      %v1172 = vsel %vm446, %v1171, %v1157
      %v1175 = vrot.slane %v1165, 4
      %v1176 = vrot.slane %v1172, 4
      %1179 = vst [vmem:[#allocation3 + $0x10] sm:$0xf0] %v1175
      %1180 = vst [vmem:[#allocation3 + $0x18] sm:$0xf0] %v1176
      %v1181 = vld [vmem:[#allocation2 + $0x1] sm:$0xff]
      %v1182 = vld [vmem:[#allocation2 + $0x9] sm:$0xff]
      %v1183 = vld [vmem:[#allocation2 + $0x19] sm:$0xff]
      %v1184 = vld [vmem:[#allocation2 + $0x21] sm:$0xff]
      %v1185 = vld [vmem:[#allocation2 + $0x31] sm:$0xff]
      %v1186 = vld [vmem:[#allocation2 + $0x39] sm:$0xff]
      %v1187 = vld [vmem:[#allocation2 + $0x49] sm:$0xff]
      %v1188 = vld [vmem:[#allocation2 + $0x51] sm:$0xff]
      %1197 = vrot.lane.b32.xlu0 %v1181, 127
      %v1198 = vpop.permute.xlu0 %1197
      %1199 = vrot.lane.b32.xlu0 %v1182, 127
      %v1200 = vpop.permute.xlu0 %1199
      %1201 = vrot.lane.b32.xlu0 %v1183, 127
      %v1202 = vpop.permute.xlu0 %1201
      %1203 = vrot.lane.b32.xlu0 %v1184, 127
      %v1204 = vpop.permute.xlu0 %1203
      %1205 = vrot.lane.b32.xlu0 %v1185, 127
      %v1206 = vpop.permute.xlu0 %1205
      %1207 = vrot.lane.b32.xlu0 %v1186, 127
      %v1208 = vpop.permute.xlu0 %1207
      %1209 = vrot.lane.b32.xlu0 %v1187, 127
      %v1210 = vpop.permute.xlu0 %1209
      %1211 = vrot.lane.b32.xlu0 %v1188, 127
      %v1212 = vpop.permute.xlu0 %1211
      %v1221 = vcombine.low %v1198, %v1206
      %v1222 = vcombine.high %v1198, %v1206
      %v1224 = vunpack.c.l.s4 1983009808
      %v1225 = vunpack.c.0.s8 %v1224
      %v1226 = vlaneseq
      %v1227 = vshrl.u32 %v1226, 7
      %v1228 = vsub.s32 %v1225, %v1227
      %v1229 = vrot.slane %v1221, %v1228
      %v1231 = vunpack.c.l.s4 1983009808
      %v1232 = vunpack.c.0.s8 %v1231
      %v1233 = vlaneseq
      %v1234 = vshrl.u32 %v1233, 7
      %v1235 = vsub.s32 %v1232, %v1234
      %v1236 = vrot.slane %v1222, %v1235
      %v1237 = vcombine.low %v1202, %v1210
      %v1238 = vcombine.high %v1202, %v1210
      %v1240 = vunpack.c.l.s4 1983009808
      %v1241 = vunpack.c.0.s8 %v1240
      %v1242 = vlaneseq
      %v1243 = vshrl.u32 %v1242, 7
      %v1244 = vsub.s32 %v1241, %v1243
      %v1245 = vrot.slane %v1237, %v1244
      %v1247 = vunpack.c.l.s4 1983009808
      %v1248 = vunpack.c.0.s8 %v1247
      %v1249 = vlaneseq
      %v1250 = vshrl.u32 %v1249, 7
      %v1251 = vsub.s32 %v1248, %v1250
      %v1252 = vrot.slane %v1238, %v1251
      %v1253 = vcombine.low %v1229, %v1245
      %v1254 = vcombine.high %v1229, %v1245
      %v1256 = vunpack.c.l.s4 1934713408
      %v1257 = vunpack.c.0.s8 %v1256
      %v1258 = vlaneseq
      %v1259 = vshrl.u32 %v1258, 7
      %v1260 = vsub.s32 %v1257, %v1259
      %v1261 = vrot.slane %v1253, %v1260
      %v1263 = vunpack.c.l.s4 1934713408
      %v1264 = vunpack.c.0.s8 %v1263
      %v1265 = vlaneseq
      %v1266 = vshrl.u32 %v1265, 7
      %v1267 = vsub.s32 %v1264, %v1266
      %v1268 = vrot.slane %v1254, %v1267
      %v1269 = vcombine.low %v1236, %v1252
      %v1270 = vcombine.high %v1236, %v1252
      %v1272 = vunpack.c.l.s4 1934713408
      %v1273 = vunpack.c.0.s8 %v1272
      %v1274 = vlaneseq
      %v1275 = vshrl.u32 %v1274, 7
      %v1276 = vsub.s32 %v1273, %v1275
      %v1277 = vrot.slane %v1269, %v1276
      %v1279 = vunpack.c.l.s4 1934713408
      %v1280 = vunpack.c.0.s8 %v1279
      %v1281 = vlaneseq
      %v1282 = vshrl.u32 %v1281, 7
      %v1283 = vsub.s32 %v1280, %v1282
      %v1284 = vrot.slane %v1270, %v1283
      %v1285 = vcombine.high %v1261, 0.0
      %v1286 = vcombine.high %v1268, 0.0
      %v1287 = vcombine.high %v1277, 0.0
      %v1288 = vcombine.high %v1284, 0.0
      %v1289 = vcombine.low %v1200, %v1208
      %v1290 = vcombine.high %v1200, %v1208
      %v1292 = vunpack.c.l.s4 1983009808
      %v1293 = vunpack.c.0.s8 %v1292
      %v1294 = vlaneseq
      %v1295 = vshrl.u32 %v1294, 7
      %v1296 = vsub.s32 %v1293, %v1295
      %v1297 = vrot.slane %v1289, %v1296
      %v1299 = vunpack.c.l.s4 1983009808
      %v1300 = vunpack.c.0.s8 %v1299
      %v1301 = vlaneseq
      %v1302 = vshrl.u32 %v1301, 7
      %v1303 = vsub.s32 %v1300, %v1302
      %v1304 = vrot.slane %v1290, %v1303
      %v1305 = vcombine.low %v1204, %v1212
      %v1306 = vcombine.high %v1204, %v1212
      %v1308 = vunpack.c.l.s4 1983009808
      %v1309 = vunpack.c.0.s8 %v1308
      %v1310 = vlaneseq
      %v1311 = vshrl.u32 %v1310, 7
      %v1312 = vsub.s32 %v1309, %v1311
      %v1313 = vrot.slane %v1305, %v1312
      %v1315 = vunpack.c.l.s4 1983009808
      %v1316 = vunpack.c.0.s8 %v1315
      %v1317 = vlaneseq
      %v1318 = vshrl.u32 %v1317, 7
      %v1319 = vsub.s32 %v1316, %v1318
      %v1320 = vrot.slane %v1306, %v1319
      %v1321 = vcombine.low %v1297, %v1313
      %v1322 = vcombine.high %v1297, %v1313
      %v1324 = vunpack.c.l.s4 1934713408
      %v1325 = vunpack.c.0.s8 %v1324
      %v1326 = vlaneseq
      %v1327 = vshrl.u32 %v1326, 7
      %v1328 = vsub.s32 %v1325, %v1327
      %v1329 = vrot.slane %v1321, %v1328
      %v1331 = vunpack.c.l.s4 1934713408
      %v1332 = vunpack.c.0.s8 %v1331
      %v1333 = vlaneseq
      %v1334 = vshrl.u32 %v1333, 7
      %v1335 = vsub.s32 %v1332, %v1334
      %v1336 = vrot.slane %v1322, %v1335
      %v1337 = vcombine.low %v1304, %v1320
      %v1338 = vcombine.high %v1304, %v1320
      %v1340 = vunpack.c.l.s4 1934713408
      %v1341 = vunpack.c.0.s8 %v1340
      %v1342 = vlaneseq
      %v1343 = vshrl.u32 %v1342, 7
      %v1344 = vsub.s32 %v1341, %v1343
      %v1345 = vrot.slane %v1337, %v1344
      %v1347 = vunpack.c.l.s4 1934713408
      %v1348 = vunpack.c.0.s8 %v1347
      %v1349 = vlaneseq
      %v1350 = vshrl.u32 %v1349, 7
      %v1351 = vsub.s32 %v1348, %v1350
      %v1352 = vrot.slane %v1338, %v1351
      %v1353 = vcombine.high %v1329, 0.0
      %v1354 = vcombine.high %v1336, 0.0
      %v1355 = vcombine.high %v1345, 0.0
      %v1356 = vcombine.high %v1352, 0.0
      %1358 = vrot.lane.b32.xlu0 %v1285, 16
      %v1359 = vpop.permute.xlu0 %1358
      %1362 = vrot.lane.b32.xlu0 %v1268, 32
      %v1363 = vpop.permute.xlu0 %1362
      %1366 = vrot.lane.b32.xlu0 %v1286, 48
      %v1367 = vpop.permute.xlu0 %1366
      %1370 = vrot.lane.b32.xlu0 %v1277, 64
      %v1371 = vpop.permute.xlu0 %1370
      %1374 = vrot.lane.b32.xlu0 %v1287, 80
      %v1375 = vpop.permute.xlu0 %1374
      %1378 = vrot.lane.b32.xlu0 %v1284, 96
      %v1379 = vpop.permute.xlu0 %1378
      %1382 = vrot.lane.b32.xlu0 %v1288, 112
      %v1383 = vpop.permute.xlu0 %1382
      %1386 = vrot.lane.b32.xlu0 %v1353, 16
      %v1387 = vpop.permute.xlu0 %1386
      %1390 = vrot.lane.b32.xlu0 %v1336, 32
      %v1391 = vpop.permute.xlu0 %1390
      %1394 = vrot.lane.b32.xlu0 %v1354, 48
      %v1395 = vpop.permute.xlu0 %1394
      %1398 = vrot.lane.b32.xlu0 %v1345, 64
      %v1399 = vpop.permute.xlu0 %1398
      %1402 = vrot.lane.b32.xlu0 %v1355, 80
      %v1403 = vpop.permute.xlu0 %1402
      %1406 = vrot.lane.b32.xlu0 %v1352, 96
      %v1407 = vpop.permute.xlu0 %1406
      %1410 = vrot.lane.b32.xlu0 %v1356, 112
      %v1411 = vpop.permute.xlu0 %1410
      %v1413 = vsel %vm434, %v1261, %v1359
      %v1414 = vsel %vm436, %v1413, %v1363
      %v1415 = vsel %vm438, %v1414, %v1367
      %v1416 = vsel %vm440, %v1415, %v1371
      %v1417 = vsel %vm442, %v1416, %v1375
      %v1418 = vsel %vm444, %v1417, %v1379
      %v1419 = vsel %vm446, %v1418, %v1383
      %v1420 = vsel %vm434, %v1329, %v1387
      %v1421 = vsel %vm436, %v1420, %v1391
      %v1422 = vsel %vm438, %v1421, %v1395
      %v1423 = vsel %vm440, %v1422, %v1399
      %v1424 = vsel %vm442, %v1423, %v1403
      %v1425 = vsel %vm444, %v1424, %v1407
      %v1426 = vsel %vm446, %v1425, %v1411
      %1427 = vst [vmem:[#allocation3 + $0x20] sm:$0xf] %v1419
      %1428 = vst [vmem:[#allocation3 + $0x28] sm:$0xf] %v1426
      %v1429 = vld [vmem:[#allocation2 + $0x1] sm:$0xff]
      %v1430 = vld [vmem:[#allocation2 + $0x9] sm:$0xff]
      %v1431 = vld [vmem:[#allocation2 + $0x19] sm:$0xff]
      %v1432 = vld [vmem:[#allocation2 + $0x21] sm:$0xff]
      %v1433 = vld [vmem:[#allocation2 + $0x31] sm:$0xff]
      %v1434 = vld [vmem:[#allocation2 + $0x39] sm:$0xff]
      %v1435 = vld [vmem:[#allocation2 + $0x49] sm:$0xff]
      %v1436 = vld [vmem:[#allocation2 + $0x51] sm:$0xff]
      %1445 = vrot.lane.b32.xlu0 %v1429, 126
      %v1446 = vpop.permute.xlu0 %1445
      %1447 = vrot.lane.b32.xlu0 %v1430, 126
      %v1448 = vpop.permute.xlu0 %1447
      %1449 = vrot.lane.b32.xlu0 %v1431, 126
      %v1450 = vpop.permute.xlu0 %1449
      %1451 = vrot.lane.b32.xlu0 %v1432, 126
      %v1452 = vpop.permute.xlu0 %1451
      %1453 = vrot.lane.b32.xlu0 %v1433, 126
      %v1454 = vpop.permute.xlu0 %1453
      %1455 = vrot.lane.b32.xlu0 %v1434, 126
      %v1456 = vpop.permute.xlu0 %1455
      %1457 = vrot.lane.b32.xlu0 %v1435, 126
      %v1458 = vpop.permute.xlu0 %1457
      %1459 = vrot.lane.b32.xlu0 %v1436, 126
      %v1460 = vpop.permute.xlu0 %1459
      %v1469 = vcombine.low %v1446, %v1454
      %v1470 = vcombine.high %v1446, %v1454
      %v1472 = vunpack.c.l.s4 1983009808
      %v1473 = vunpack.c.0.s8 %v1472
      %v1474 = vlaneseq
      %v1475 = vshrl.u32 %v1474, 7
      %v1476 = vsub.s32 %v1473, %v1475
      %v1477 = vrot.slane %v1469, %v1476
      %v1479 = vunpack.c.l.s4 1983009808
      %v1480 = vunpack.c.0.s8 %v1479
      %v1481 = vlaneseq
      %v1482 = vshrl.u32 %v1481, 7
      %v1483 = vsub.s32 %v1480, %v1482
      %v1484 = vrot.slane %v1470, %v1483
      %v1485 = vcombine.low %v1450, %v1458
      %v1486 = vcombine.high %v1450, %v1458
      %v1488 = vunpack.c.l.s4 1983009808
      %v1489 = vunpack.c.0.s8 %v1488
      %v1490 = vlaneseq
      %v1491 = vshrl.u32 %v1490, 7
      %v1492 = vsub.s32 %v1489, %v1491
      %v1493 = vrot.slane %v1485, %v1492
      %v1495 = vunpack.c.l.s4 1983009808
      %v1496 = vunpack.c.0.s8 %v1495
      %v1497 = vlaneseq
      %v1498 = vshrl.u32 %v1497, 7
      %v1499 = vsub.s32 %v1496, %v1498
      %v1500 = vrot.slane %v1486, %v1499
      %v1501 = vcombine.low %v1477, %v1493
      %v1502 = vcombine.high %v1477, %v1493
      %v1504 = vunpack.c.l.s4 1934713408
      %v1505 = vunpack.c.0.s8 %v1504
      %v1506 = vlaneseq
      %v1507 = vshrl.u32 %v1506, 7
      %v1508 = vsub.s32 %v1505, %v1507
      %v1509 = vrot.slane %v1501, %v1508
      %v1511 = vunpack.c.l.s4 1934713408
      %v1512 = vunpack.c.0.s8 %v1511
      %v1513 = vlaneseq
      %v1514 = vshrl.u32 %v1513, 7
      %v1515 = vsub.s32 %v1512, %v1514
      %v1516 = vrot.slane %v1502, %v1515
      %v1517 = vcombine.low %v1484, %v1500
      %v1518 = vcombine.high %v1484, %v1500
      %v1520 = vunpack.c.l.s4 1934713408
      %v1521 = vunpack.c.0.s8 %v1520
      %v1522 = vlaneseq
      %v1523 = vshrl.u32 %v1522, 7
      %v1524 = vsub.s32 %v1521, %v1523
      %v1525 = vrot.slane %v1517, %v1524
      %v1527 = vunpack.c.l.s4 1934713408
      %v1528 = vunpack.c.0.s8 %v1527
      %v1529 = vlaneseq
      %v1530 = vshrl.u32 %v1529, 7
      %v1531 = vsub.s32 %v1528, %v1530
      %v1532 = vrot.slane %v1518, %v1531
      %v1533 = vcombine.high %v1509, 0.0
      %v1534 = vcombine.high %v1516, 0.0
      %v1535 = vcombine.high %v1525, 0.0
      %v1536 = vcombine.high %v1532, 0.0
      %v1537 = vcombine.low %v1448, %v1456
      %v1538 = vcombine.high %v1448, %v1456
      %v1540 = vunpack.c.l.s4 1983009808
      %v1541 = vunpack.c.0.s8 %v1540
      %v1542 = vlaneseq
      %v1543 = vshrl.u32 %v1542, 7
      %v1544 = vsub.s32 %v1541, %v1543
      %v1545 = vrot.slane %v1537, %v1544
      %v1547 = vunpack.c.l.s4 1983009808
      %v1548 = vunpack.c.0.s8 %v1547
      %v1549 = vlaneseq
      %v1550 = vshrl.u32 %v1549, 7
      %v1551 = vsub.s32 %v1548, %v1550
      %v1552 = vrot.slane %v1538, %v1551
      %v1553 = vcombine.low %v1452, %v1460
      %v1554 = vcombine.high %v1452, %v1460
      %v1556 = vunpack.c.l.s4 1983009808
      %v1557 = vunpack.c.0.s8 %v1556
      %v1558 = vlaneseq
      %v1559 = vshrl.u32 %v1558, 7
      %v1560 = vsub.s32 %v1557, %v1559
      %v1561 = vrot.slane %v1553, %v1560
      %v1563 = vunpack.c.l.s4 1983009808
      %v1564 = vunpack.c.0.s8 %v1563
      %v1565 = vlaneseq
      %v1566 = vshrl.u32 %v1565, 7
      %v1567 = vsub.s32 %v1564, %v1566
      %v1568 = vrot.slane %v1554, %v1567
      %v1569 = vcombine.low %v1545, %v1561
      %v1570 = vcombine.high %v1545, %v1561
      %v1572 = vunpack.c.l.s4 1934713408
      %v1573 = vunpack.c.0.s8 %v1572
      %v1574 = vlaneseq
      %v1575 = vshrl.u32 %v1574, 7
      %v1576 = vsub.s32 %v1573, %v1575
      %v1577 = vrot.slane %v1569, %v1576
      %v1579 = vunpack.c.l.s4 1934713408
      %v1580 = vunpack.c.0.s8 %v1579
      %v1581 = vlaneseq
      %v1582 = vshrl.u32 %v1581, 7
      %v1583 = vsub.s32 %v1580, %v1582
      %v1584 = vrot.slane %v1570, %v1583
      %v1585 = vcombine.low %v1552, %v1568
      %v1586 = vcombine.high %v1552, %v1568
      %v1588 = vunpack.c.l.s4 1934713408
      %v1589 = vunpack.c.0.s8 %v1588
      %v1590 = vlaneseq
      %v1591 = vshrl.u32 %v1590, 7
      %v1592 = vsub.s32 %v1589, %v1591
      %v1593 = vrot.slane %v1585, %v1592
      %v1595 = vunpack.c.l.s4 1934713408
      %v1596 = vunpack.c.0.s8 %v1595
      %v1597 = vlaneseq
      %v1598 = vshrl.u32 %v1597, 7
      %v1599 = vsub.s32 %v1596, %v1598
      %v1600 = vrot.slane %v1586, %v1599
      %v1601 = vcombine.high %v1577, 0.0
      %v1602 = vcombine.high %v1584, 0.0
      %v1603 = vcombine.high %v1593, 0.0
      %v1604 = vcombine.high %v1600, 0.0
      %1606 = vrot.lane.b32.xlu0 %v1533, 16
      %v1607 = vpop.permute.xlu0 %1606
      %1610 = vrot.lane.b32.xlu0 %v1516, 32
      %v1611 = vpop.permute.xlu0 %1610
      %1614 = vrot.lane.b32.xlu0 %v1534, 48
      %v1615 = vpop.permute.xlu0 %1614
      %1618 = vrot.lane.b32.xlu0 %v1525, 64
      %v1619 = vpop.permute.xlu0 %1618
      %1622 = vrot.lane.b32.xlu0 %v1535, 80
      %v1623 = vpop.permute.xlu0 %1622
      %1626 = vrot.lane.b32.xlu0 %v1532, 96
      %v1627 = vpop.permute.xlu0 %1626
      %1630 = vrot.lane.b32.xlu0 %v1536, 112
      %v1631 = vpop.permute.xlu0 %1630
      %1634 = vrot.lane.b32.xlu0 %v1601, 16
      %v1635 = vpop.permute.xlu0 %1634
      %1638 = vrot.lane.b32.xlu0 %v1584, 32
      %v1639 = vpop.permute.xlu0 %1638
      %1642 = vrot.lane.b32.xlu0 %v1602, 48
      %v1643 = vpop.permute.xlu0 %1642
      %1646 = vrot.lane.b32.xlu0 %v1593, 64
      %v1647 = vpop.permute.xlu0 %1646
      %1650 = vrot.lane.b32.xlu0 %v1603, 80
      %v1651 = vpop.permute.xlu0 %1650
      %1654 = vrot.lane.b32.xlu0 %v1600, 96
      %v1655 = vpop.permute.xlu0 %1654
      %1658 = vrot.lane.b32.xlu0 %v1604, 112
      %v1659 = vpop.permute.xlu0 %1658
      %v1661 = vsel %vm434, %v1509, %v1607
      %v1662 = vsel %vm436, %v1661, %v1611
      %v1663 = vsel %vm438, %v1662, %v1615
      %v1664 = vsel %vm440, %v1663, %v1619
      %v1665 = vsel %vm442, %v1664, %v1623
      %v1666 = vsel %vm444, %v1665, %v1627
      %v1667 = vsel %vm446, %v1666, %v1631
      %v1668 = vsel %vm434, %v1577, %v1635
      %v1669 = vsel %vm436, %v1668, %v1639
      %v1670 = vsel %vm438, %v1669, %v1643
      %v1671 = vsel %vm440, %v1670, %v1647
      %v1672 = vsel %vm442, %v1671, %v1651
      %v1673 = vsel %vm444, %v1672, %v1655
      %v1674 = vsel %vm446, %v1673, %v1659
      %v1677 = vrot.slane %v1667, 4
      %v1678 = vrot.slane %v1674, 4
      %1681 = vst [vmem:[#allocation3 + $0x20] sm:$0xf0] %v1677
      %1682 = vst [vmem:[#allocation3 + $0x28] sm:$0xf0] %v1678
      %v1683 = vld [vmem:[#allocation2 + $0x2] sm:$0xff]
      %v1684 = vld [vmem:[#allocation2 + $0xa] sm:$0xff]
      %v1685 = vld [vmem:[#allocation2 + $0x1a] sm:$0xff]
      %v1686 = vld [vmem:[#allocation2 + $0x22] sm:$0xff]
      %v1687 = vld [vmem:[#allocation2 + $0x32] sm:$0xff]
      %v1688 = vld [vmem:[#allocation2 + $0x3a] sm:$0xff]
      %v1689 = vld [vmem:[#allocation2 + $0x4a] sm:$0xff]
      %v1690 = vld [vmem:[#allocation2 + $0x52] sm:$0xff]
      %v1691 = vcombine.low %v1683, %v1687
      %v1692 = vcombine.high %v1683, %v1687
      %v1694 = vunpack.c.l.s4 1983009808
      %v1695 = vunpack.c.0.s8 %v1694
      %v1696 = vlaneseq
      %v1697 = vshrl.u32 %v1696, 7
      %v1698 = vsub.s32 %v1695, %v1697
      %v1699 = vrot.slane %v1691, %v1698
      %v1701 = vunpack.c.l.s4 1983009808
      %v1702 = vunpack.c.0.s8 %v1701
      %v1703 = vlaneseq
      %v1704 = vshrl.u32 %v1703, 7
      %v1705 = vsub.s32 %v1702, %v1704
      %v1706 = vrot.slane %v1692, %v1705
      %v1707 = vcombine.low %v1685, %v1689
      %v1708 = vcombine.high %v1685, %v1689
      %v1710 = vunpack.c.l.s4 1983009808
      %v1711 = vunpack.c.0.s8 %v1710
      %v1712 = vlaneseq
      %v1713 = vshrl.u32 %v1712, 7
      %v1714 = vsub.s32 %v1711, %v1713
      %v1715 = vrot.slane %v1707, %v1714
      %v1717 = vunpack.c.l.s4 1983009808
      %v1718 = vunpack.c.0.s8 %v1717
      %v1719 = vlaneseq
      %v1720 = vshrl.u32 %v1719, 7
      %v1721 = vsub.s32 %v1718, %v1720
      %v1722 = vrot.slane %v1708, %v1721
      %v1723 = vcombine.low %v1699, %v1715
      %v1724 = vcombine.high %v1699, %v1715
      %v1726 = vunpack.c.l.s4 1934713408
      %v1727 = vunpack.c.0.s8 %v1726
      %v1728 = vlaneseq
      %v1729 = vshrl.u32 %v1728, 7
      %v1730 = vsub.s32 %v1727, %v1729
      %v1731 = vrot.slane %v1723, %v1730
      %v1733 = vunpack.c.l.s4 1934713408
      %v1734 = vunpack.c.0.s8 %v1733
      %v1735 = vlaneseq
      %v1736 = vshrl.u32 %v1735, 7
      %v1737 = vsub.s32 %v1734, %v1736
      %v1738 = vrot.slane %v1724, %v1737
      %v1739 = vcombine.low %v1706, %v1722
      %v1740 = vcombine.high %v1706, %v1722
      %v1742 = vunpack.c.l.s4 1934713408
      %v1743 = vunpack.c.0.s8 %v1742
      %v1744 = vlaneseq
      %v1745 = vshrl.u32 %v1744, 7
      %v1746 = vsub.s32 %v1743, %v1745
      %v1747 = vrot.slane %v1739, %v1746
      %v1749 = vunpack.c.l.s4 1934713408
      %v1750 = vunpack.c.0.s8 %v1749
      %v1751 = vlaneseq
      %v1752 = vshrl.u32 %v1751, 7
      %v1753 = vsub.s32 %v1750, %v1752
      %v1754 = vrot.slane %v1740, %v1753
      %v1755 = vcombine.high %v1731, 0.0
      %v1756 = vcombine.high %v1738, 0.0
      %v1757 = vcombine.high %v1747, 0.0
      %v1758 = vcombine.high %v1754, 0.0
      %v1759 = vcombine.low %v1684, %v1688
      %v1760 = vcombine.high %v1684, %v1688
      %v1762 = vunpack.c.l.s4 1983009808
      %v1763 = vunpack.c.0.s8 %v1762
      %v1764 = vlaneseq
      %v1765 = vshrl.u32 %v1764, 7
      %v1766 = vsub.s32 %v1763, %v1765
      %v1767 = vrot.slane %v1759, %v1766
      %v1769 = vunpack.c.l.s4 1983009808
      %v1770 = vunpack.c.0.s8 %v1769
      %v1771 = vlaneseq
      %v1772 = vshrl.u32 %v1771, 7
      %v1773 = vsub.s32 %v1770, %v1772
      %v1774 = vrot.slane %v1760, %v1773
      %v1775 = vcombine.low %v1686, %v1690
      %v1776 = vcombine.high %v1686, %v1690
      %v1778 = vunpack.c.l.s4 1983009808
      %v1779 = vunpack.c.0.s8 %v1778
      %v1780 = vlaneseq
      %v1781 = vshrl.u32 %v1780, 7
      %v1782 = vsub.s32 %v1779, %v1781
      %v1783 = vrot.slane %v1775, %v1782
      %v1785 = vunpack.c.l.s4 1983009808
      %v1786 = vunpack.c.0.s8 %v1785
      %v1787 = vlaneseq
      %v1788 = vshrl.u32 %v1787, 7
      %v1789 = vsub.s32 %v1786, %v1788
      %v1790 = vrot.slane %v1776, %v1789
      %v1791 = vcombine.low %v1767, %v1783
      %v1792 = vcombine.high %v1767, %v1783
      %v1794 = vunpack.c.l.s4 1934713408
      %v1795 = vunpack.c.0.s8 %v1794
      %v1796 = vlaneseq
      %v1797 = vshrl.u32 %v1796, 7
      %v1798 = vsub.s32 %v1795, %v1797
      %v1799 = vrot.slane %v1791, %v1798
      %v1801 = vunpack.c.l.s4 1934713408
      %v1802 = vunpack.c.0.s8 %v1801
      %v1803 = vlaneseq
      %v1804 = vshrl.u32 %v1803, 7
      %v1805 = vsub.s32 %v1802, %v1804
      %v1806 = vrot.slane %v1792, %v1805
      %v1807 = vcombine.low %v1774, %v1790
      %v1808 = vcombine.high %v1774, %v1790
      %v1810 = vunpack.c.l.s4 1934713408
      %v1811 = vunpack.c.0.s8 %v1810
      %v1812 = vlaneseq
      %v1813 = vshrl.u32 %v1812, 7
      %v1814 = vsub.s32 %v1811, %v1813
      %v1815 = vrot.slane %v1807, %v1814
      %v1817 = vunpack.c.l.s4 1934713408
      %v1818 = vunpack.c.0.s8 %v1817
      %v1819 = vlaneseq
      %v1820 = vshrl.u32 %v1819, 7
      %v1821 = vsub.s32 %v1818, %v1820
      %v1822 = vrot.slane %v1808, %v1821
      %v1823 = vcombine.high %v1799, 0.0
      %v1824 = vcombine.high %v1806, 0.0
      %v1825 = vcombine.high %v1815, 0.0
      %v1826 = vcombine.high %v1822, 0.0
      %1828 = vrot.lane.b32.xlu0 %v1755, 16
      %v1829 = vpop.permute.xlu0 %1828
      %1832 = vrot.lane.b32.xlu0 %v1738, 32
      %v1833 = vpop.permute.xlu0 %1832
      %1836 = vrot.lane.b32.xlu0 %v1756, 48
      %v1837 = vpop.permute.xlu0 %1836
      %1840 = vrot.lane.b32.xlu0 %v1747, 64
      %v1841 = vpop.permute.xlu0 %1840
      %1844 = vrot.lane.b32.xlu0 %v1757, 80
      %v1845 = vpop.permute.xlu0 %1844
      %1848 = vrot.lane.b32.xlu0 %v1754, 96
      %v1849 = vpop.permute.xlu0 %1848
      %1852 = vrot.lane.b32.xlu0 %v1758, 112
      %v1853 = vpop.permute.xlu0 %1852
      %1856 = vrot.lane.b32.xlu0 %v1823, 16
      %v1857 = vpop.permute.xlu0 %1856
      %1860 = vrot.lane.b32.xlu0 %v1806, 32
      %v1861 = vpop.permute.xlu0 %1860
      %1864 = vrot.lane.b32.xlu0 %v1824, 48
      %v1865 = vpop.permute.xlu0 %1864
      %1868 = vrot.lane.b32.xlu0 %v1815, 64
      %v1869 = vpop.permute.xlu0 %1868
      %1872 = vrot.lane.b32.xlu0 %v1825, 80
      %v1873 = vpop.permute.xlu0 %1872
      %1876 = vrot.lane.b32.xlu0 %v1822, 96
      %v1877 = vpop.permute.xlu0 %1876
      %1880 = vrot.lane.b32.xlu0 %v1826, 112
      %v1881 = vpop.permute.xlu0 %1880
      %v1883 = vsel %vm434, %v1731, %v1829
      %v1884 = vsel %vm436, %v1883, %v1833
      %v1885 = vsel %vm438, %v1884, %v1837
      %v1886 = vsel %vm440, %v1885, %v1841
      %v1887 = vsel %vm442, %v1886, %v1845
      %v1888 = vsel %vm444, %v1887, %v1849
      %v1889 = vsel %vm446, %v1888, %v1853
      %v1890 = vsel %vm434, %v1799, %v1857
      %v1891 = vsel %vm436, %v1890, %v1861
      %v1892 = vsel %vm438, %v1891, %v1865
      %v1893 = vsel %vm440, %v1892, %v1869
      %v1894 = vsel %vm442, %v1893, %v1873
      %v1895 = vsel %vm444, %v1894, %v1877
      %v1896 = vsel %vm446, %v1895, %v1881
      %1897 = vst [vmem:[#allocation3 + $0x30] sm:$0xf] %v1889
      %1898 = vst [vmem:[#allocation3 + $0x38] sm:$0xf] %v1896
      %v1899 = vld [vmem:[#allocation2 + $0x2] sm:$0xff]
      %v1900 = vld [vmem:[#allocation2 + $0xa] sm:$0xff]
      %v1901 = vld [vmem:[#allocation2 + $0x1a] sm:$0xff]
      %v1902 = vld [vmem:[#allocation2 + $0x22] sm:$0xff]
      %v1903 = vld [vmem:[#allocation2 + $0x32] sm:$0xff]
      %v1904 = vld [vmem:[#allocation2 + $0x3a] sm:$0xff]
      %v1905 = vld [vmem:[#allocation2 + $0x4a] sm:$0xff]
      %v1906 = vld [vmem:[#allocation2 + $0x52] sm:$0xff]
      %1915 = vrot.lane.b32.xlu0 %v1899, 127
      %v1916 = vpop.permute.xlu0 %1915
      %1917 = vrot.lane.b32.xlu0 %v1900, 127
      %v1918 = vpop.permute.xlu0 %1917
      %1919 = vrot.lane.b32.xlu0 %v1901, 127
      %v1920 = vpop.permute.xlu0 %1919
      %1921 = vrot.lane.b32.xlu0 %v1902, 127
      %v1922 = vpop.permute.xlu0 %1921
      %1923 = vrot.lane.b32.xlu0 %v1903, 127
      %v1924 = vpop.permute.xlu0 %1923
      %1925 = vrot.lane.b32.xlu0 %v1904, 127
      %v1926 = vpop.permute.xlu0 %1925
      %1927 = vrot.lane.b32.xlu0 %v1905, 127
      %v1928 = vpop.permute.xlu0 %1927
      %1929 = vrot.lane.b32.xlu0 %v1906, 127
      %v1930 = vpop.permute.xlu0 %1929
      %v1939 = vcombine.low %v1916, %v1924
      %v1940 = vcombine.high %v1916, %v1924
      %v1942 = vunpack.c.l.s4 1983009808
      %v1943 = vunpack.c.0.s8 %v1942
      %v1944 = vlaneseq
      %v1945 = vshrl.u32 %v1944, 7
      %v1946 = vsub.s32 %v1943, %v1945
      %v1947 = vrot.slane %v1939, %v1946
      %v1949 = vunpack.c.l.s4 1983009808
      %v1950 = vunpack.c.0.s8 %v1949
      %v1951 = vlaneseq
      %v1952 = vshrl.u32 %v1951, 7
      %v1953 = vsub.s32 %v1950, %v1952
      %v1954 = vrot.slane %v1940, %v1953
      %v1955 = vcombine.low %v1920, %v1928
      %v1956 = vcombine.high %v1920, %v1928
      %v1958 = vunpack.c.l.s4 1983009808
      %v1959 = vunpack.c.0.s8 %v1958
      %v1960 = vlaneseq
      %v1961 = vshrl.u32 %v1960, 7
      %v1962 = vsub.s32 %v1959, %v1961
      %v1963 = vrot.slane %v1955, %v1962
      %v1965 = vunpack.c.l.s4 1983009808
      %v1966 = vunpack.c.0.s8 %v1965
      %v1967 = vlaneseq
      %v1968 = vshrl.u32 %v1967, 7
      %v1969 = vsub.s32 %v1966, %v1968
      %v1970 = vrot.slane %v1956, %v1969
      %v1971 = vcombine.low %v1947, %v1963
      %v1972 = vcombine.high %v1947, %v1963
      %v1974 = vunpack.c.l.s4 1934713408
      %v1975 = vunpack.c.0.s8 %v1974
      %v1976 = vlaneseq
      %v1977 = vshrl.u32 %v1976, 7
      %v1978 = vsub.s32 %v1975, %v1977
      %v1979 = vrot.slane %v1971, %v1978
      %v1981 = vunpack.c.l.s4 1934713408
      %v1982 = vunpack.c.0.s8 %v1981
      %v1983 = vlaneseq
      %v1984 = vshrl.u32 %v1983, 7
      %v1985 = vsub.s32 %v1982, %v1984
      %v1986 = vrot.slane %v1972, %v1985
      %v1987 = vcombine.low %v1954, %v1970
      %v1988 = vcombine.high %v1954, %v1970
      %v1990 = vunpack.c.l.s4 1934713408
      %v1991 = vunpack.c.0.s8 %v1990
      %v1992 = vlaneseq
      %v1993 = vshrl.u32 %v1992, 7
      %v1994 = vsub.s32 %v1991, %v1993
      %v1995 = vrot.slane %v1987, %v1994
      %v1997 = vunpack.c.l.s4 1934713408
      %v1998 = vunpack.c.0.s8 %v1997
      %v1999 = vlaneseq
      %v2000 = vshrl.u32 %v1999, 7
      %v2001 = vsub.s32 %v1998, %v2000
      %v2002 = vrot.slane %v1988, %v2001
      %v2003 = vcombine.high %v1979, 0.0
      %v2004 = vcombine.high %v1986, 0.0
      %v2005 = vcombine.high %v1995, 0.0
      %v2006 = vcombine.high %v2002, 0.0
      %v2007 = vcombine.low %v1918, %v1926
      %v2008 = vcombine.high %v1918, %v1926
      %v2010 = vunpack.c.l.s4 1983009808
      %v2011 = vunpack.c.0.s8 %v2010
      %v2012 = vlaneseq
      %v2013 = vshrl.u32 %v2012, 7
      %v2014 = vsub.s32 %v2011, %v2013
      %v2015 = vrot.slane %v2007, %v2014
      %v2017 = vunpack.c.l.s4 1983009808
      %v2018 = vunpack.c.0.s8 %v2017
      %v2019 = vlaneseq
      %v2020 = vshrl.u32 %v2019, 7
      %v2021 = vsub.s32 %v2018, %v2020
      %v2022 = vrot.slane %v2008, %v2021
      %v2023 = vcombine.low %v1922, %v1930
      %v2024 = vcombine.high %v1922, %v1930
      %v2026 = vunpack.c.l.s4 1983009808
      %v2027 = vunpack.c.0.s8 %v2026
      %v2028 = vlaneseq
      %v2029 = vshrl.u32 %v2028, 7
      %v2030 = vsub.s32 %v2027, %v2029
      %v2031 = vrot.slane %v2023, %v2030
      %v2033 = vunpack.c.l.s4 1983009808
      %v2034 = vunpack.c.0.s8 %v2033
      %v2035 = vlaneseq
      %v2036 = vshrl.u32 %v2035, 7
      %v2037 = vsub.s32 %v2034, %v2036
      %v2038 = vrot.slane %v2024, %v2037
      %v2039 = vcombine.low %v2015, %v2031
      %v2040 = vcombine.high %v2015, %v2031
      %v2042 = vunpack.c.l.s4 1934713408
      %v2043 = vunpack.c.0.s8 %v2042
      %v2044 = vlaneseq
      %v2045 = vshrl.u32 %v2044, 7
      %v2046 = vsub.s32 %v2043, %v2045
      %v2047 = vrot.slane %v2039, %v2046
      %v2049 = vunpack.c.l.s4 1934713408
      %v2050 = vunpack.c.0.s8 %v2049
      %v2051 = vlaneseq
      %v2052 = vshrl.u32 %v2051, 7
      %v2053 = vsub.s32 %v2050, %v2052
      %v2054 = vrot.slane %v2040, %v2053
      %v2055 = vcombine.low %v2022, %v2038
      %v2056 = vcombine.high %v2022, %v2038
      %v2058 = vunpack.c.l.s4 1934713408
      %v2059 = vunpack.c.0.s8 %v2058
      %v2060 = vlaneseq
      %v2061 = vshrl.u32 %v2060, 7
      %v2062 = vsub.s32 %v2059, %v2061
      %v2063 = vrot.slane %v2055, %v2062
      %v2065 = vunpack.c.l.s4 1934713408
      %v2066 = vunpack.c.0.s8 %v2065
      %v2067 = vlaneseq
      %v2068 = vshrl.u32 %v2067, 7
      %v2069 = vsub.s32 %v2066, %v2068
      %v2070 = vrot.slane %v2056, %v2069
      %v2071 = vcombine.high %v2047, 0.0
      %v2072 = vcombine.high %v2054, 0.0
      %v2073 = vcombine.high %v2063, 0.0
      %v2074 = vcombine.high %v2070, 0.0
      %2076 = vrot.lane.b32.xlu0 %v2003, 16
      %v2077 = vpop.permute.xlu0 %2076
      %2080 = vrot.lane.b32.xlu0 %v1986, 32
      %v2081 = vpop.permute.xlu0 %2080
      %2084 = vrot.lane.b32.xlu0 %v2004, 48
      %v2085 = vpop.permute.xlu0 %2084
      %2088 = vrot.lane.b32.xlu0 %v1995, 64
      %v2089 = vpop.permute.xlu0 %2088
      %2092 = vrot.lane.b32.xlu0 %v2005, 80
      %v2093 = vpop.permute.xlu0 %2092
      %2096 = vrot.lane.b32.xlu0 %v2002, 96
      %v2097 = vpop.permute.xlu0 %2096
      %2100 = vrot.lane.b32.xlu0 %v2006, 112
      %v2101 = vpop.permute.xlu0 %2100
      %2104 = vrot.lane.b32.xlu0 %v2071, 16
      %v2105 = vpop.permute.xlu0 %2104
      %2108 = vrot.lane.b32.xlu0 %v2054, 32
      %v2109 = vpop.permute.xlu0 %2108
      %2112 = vrot.lane.b32.xlu0 %v2072, 48
      %v2113 = vpop.permute.xlu0 %2112
      %2116 = vrot.lane.b32.xlu0 %v2063, 64
      %v2117 = vpop.permute.xlu0 %2116
      %2120 = vrot.lane.b32.xlu0 %v2073, 80
      %v2121 = vpop.permute.xlu0 %2120
      %2124 = vrot.lane.b32.xlu0 %v2070, 96
      %v2125 = vpop.permute.xlu0 %2124
      %2128 = vrot.lane.b32.xlu0 %v2074, 112
      %v2129 = vpop.permute.xlu0 %2128
      %v2131 = vsel %vm434, %v1979, %v2077
      %v2132 = vsel %vm436, %v2131, %v2081
      %v2133 = vsel %vm438, %v2132, %v2085
      %v2134 = vsel %vm440, %v2133, %v2089
      %v2135 = vsel %vm442, %v2134, %v2093
      %v2136 = vsel %vm444, %v2135, %v2097
      %v2137 = vsel %vm446, %v2136, %v2101
      %v2138 = vsel %vm434, %v2047, %v2105
      %v2139 = vsel %vm436, %v2138, %v2109
      %v2140 = vsel %vm438, %v2139, %v2113
      %v2141 = vsel %vm440, %v2140, %v2117
      %v2142 = vsel %vm442, %v2141, %v2121
      %v2143 = vsel %vm444, %v2142, %v2125
      %v2144 = vsel %vm446, %v2143, %v2129
      %v2147 = vrot.slane %v2137, 4
      %v2148 = vrot.slane %v2144, 4
      %2151 = vst [vmem:[#allocation3 + $0x30] sm:$0xf0] %v2147
      %2152 = vst [vmem:[#allocation3 + $0x38] sm:$0xf0] %v2148
      %v2153 = vld [vmem:[#allocation2 + $0x2] sm:$0xff]
      %v2154 = vld [vmem:[#allocation2 + $0xa] sm:$0xff]
      %v2155 = vld [vmem:[#allocation2 + $0x1a] sm:$0xff]
      %v2156 = vld [vmem:[#allocation2 + $0x22] sm:$0xff]
      %v2157 = vld [vmem:[#allocation2 + $0x32] sm:$0xff]
      %v2158 = vld [vmem:[#allocation2 + $0x3a] sm:$0xff]
      %v2159 = vld [vmem:[#allocation2 + $0x4a] sm:$0xff]
      %v2160 = vld [vmem:[#allocation2 + $0x52] sm:$0xff]
      %2169 = vrot.lane.b32.xlu0 %v2153, 126
      %v2170 = vpop.permute.xlu0 %2169
      %2171 = vrot.lane.b32.xlu0 %v2154, 126
      %v2172 = vpop.permute.xlu0 %2171
      %2173 = vrot.lane.b32.xlu0 %v2155, 126
      %v2174 = vpop.permute.xlu0 %2173
      %2175 = vrot.lane.b32.xlu0 %v2156, 126
      %v2176 = vpop.permute.xlu0 %2175
      %2177 = vrot.lane.b32.xlu0 %v2157, 126
      %v2178 = vpop.permute.xlu0 %2177
      %2179 = vrot.lane.b32.xlu0 %v2158, 126
      %v2180 = vpop.permute.xlu0 %2179
      %2181 = vrot.lane.b32.xlu0 %v2159, 126
      %v2182 = vpop.permute.xlu0 %2181
      %2183 = vrot.lane.b32.xlu0 %v2160, 126
      %v2184 = vpop.permute.xlu0 %2183
      %v2193 = vcombine.low %v2170, %v2178
      %v2194 = vcombine.high %v2170, %v2178
      %v2196 = vunpack.c.l.s4 1983009808
      %v2197 = vunpack.c.0.s8 %v2196
      %v2198 = vlaneseq
      %v2199 = vshrl.u32 %v2198, 7
      %v2200 = vsub.s32 %v2197, %v2199
      %v2201 = vrot.slane %v2193, %v2200
      %v2203 = vunpack.c.l.s4 1983009808
      %v2204 = vunpack.c.0.s8 %v2203
      %v2205 = vlaneseq
      %v2206 = vshrl.u32 %v2205, 7
      %v2207 = vsub.s32 %v2204, %v2206
      %v2208 = vrot.slane %v2194, %v2207
      %v2209 = vcombine.low %v2174, %v2182
      %v2210 = vcombine.high %v2174, %v2182
      %v2212 = vunpack.c.l.s4 1983009808
      %v2213 = vunpack.c.0.s8 %v2212
      %v2214 = vlaneseq
      %v2215 = vshrl.u32 %v2214, 7
      %v2216 = vsub.s32 %v2213, %v2215
      %v2217 = vrot.slane %v2209, %v2216
      %v2219 = vunpack.c.l.s4 1983009808
      %v2220 = vunpack.c.0.s8 %v2219
      %v2221 = vlaneseq
      %v2222 = vshrl.u32 %v2221, 7
      %v2223 = vsub.s32 %v2220, %v2222
      %v2224 = vrot.slane %v2210, %v2223
      %v2225 = vcombine.low %v2201, %v2217
      %v2226 = vcombine.high %v2201, %v2217
      %v2228 = vunpack.c.l.s4 1934713408
      %v2229 = vunpack.c.0.s8 %v2228
      %v2230 = vlaneseq
      %v2231 = vshrl.u32 %v2230, 7
      %v2232 = vsub.s32 %v2229, %v2231
      %v2233 = vrot.slane %v2225, %v2232
      %v2235 = vunpack.c.l.s4 1934713408
      %v2236 = vunpack.c.0.s8 %v2235
      %v2237 = vlaneseq
      %v2238 = vshrl.u32 %v2237, 7
      %v2239 = vsub.s32 %v2236, %v2238
      %v2240 = vrot.slane %v2226, %v2239
      %v2241 = vcombine.low %v2208, %v2224
      %v2242 = vcombine.high %v2208, %v2224
      %v2244 = vunpack.c.l.s4 1934713408
      %v2245 = vunpack.c.0.s8 %v2244
      %v2246 = vlaneseq
      %v2247 = vshrl.u32 %v2246, 7
      %v2248 = vsub.s32 %v2245, %v2247
      %v2249 = vrot.slane %v2241, %v2248
      %v2251 = vunpack.c.l.s4 1934713408
      %v2252 = vunpack.c.0.s8 %v2251
      %v2253 = vlaneseq
      %v2254 = vshrl.u32 %v2253, 7
      %v2255 = vsub.s32 %v2252, %v2254
      %v2256 = vrot.slane %v2242, %v2255
      %v2257 = vcombine.high %v2233, 0.0
      %v2258 = vcombine.high %v2240, 0.0
      %v2259 = vcombine.high %v2249, 0.0
      %v2260 = vcombine.high %v2256, 0.0
      %v2261 = vcombine.low %v2172, %v2180
      %v2262 = vcombine.high %v2172, %v2180
      %v2264 = vunpack.c.l.s4 1983009808
      %v2265 = vunpack.c.0.s8 %v2264
      %v2266 = vlaneseq
      %v2267 = vshrl.u32 %v2266, 7
      %v2268 = vsub.s32 %v2265, %v2267
      %v2269 = vrot.slane %v2261, %v2268
      %v2271 = vunpack.c.l.s4 1983009808
      %v2272 = vunpack.c.0.s8 %v2271
      %v2273 = vlaneseq
      %v2274 = vshrl.u32 %v2273, 7
      %v2275 = vsub.s32 %v2272, %v2274
      %v2276 = vrot.slane %v2262, %v2275
      %v2277 = vcombine.low %v2176, %v2184
      %v2278 = vcombine.high %v2176, %v2184
      %v2280 = vunpack.c.l.s4 1983009808
      %v2281 = vunpack.c.0.s8 %v2280
      %v2282 = vlaneseq
      %v2283 = vshrl.u32 %v2282, 7
      %v2284 = vsub.s32 %v2281, %v2283
      %v2285 = vrot.slane %v2277, %v2284
      %v2287 = vunpack.c.l.s4 1983009808
      %v2288 = vunpack.c.0.s8 %v2287
      %v2289 = vlaneseq
      %v2290 = vshrl.u32 %v2289, 7
      %v2291 = vsub.s32 %v2288, %v2290
      %v2292 = vrot.slane %v2278, %v2291
      %v2293 = vcombine.low %v2269, %v2285
      %v2294 = vcombine.high %v2269, %v2285
      %v2296 = vunpack.c.l.s4 1934713408
      %v2297 = vunpack.c.0.s8 %v2296
      %v2298 = vlaneseq
      %v2299 = vshrl.u32 %v2298, 7
      %v2300 = vsub.s32 %v2297, %v2299
      %v2301 = vrot.slane %v2293, %v2300
      %v2303 = vunpack.c.l.s4 1934713408
      %v2304 = vunpack.c.0.s8 %v2303
      %v2305 = vlaneseq
      %v2306 = vshrl.u32 %v2305, 7
      %v2307 = vsub.s32 %v2304, %v2306
      %v2308 = vrot.slane %v2294, %v2307
      %v2309 = vcombine.low %v2276, %v2292
      %v2310 = vcombine.high %v2276, %v2292
      %v2312 = vunpack.c.l.s4 1934713408
      %v2313 = vunpack.c.0.s8 %v2312
      %v2314 = vlaneseq
      %v2315 = vshrl.u32 %v2314, 7
      %v2316 = vsub.s32 %v2313, %v2315
      %v2317 = vrot.slane %v2309, %v2316
      %v2319 = vunpack.c.l.s4 1934713408
      %v2320 = vunpack.c.0.s8 %v2319
      %v2321 = vlaneseq
      %v2322 = vshrl.u32 %v2321, 7
      %v2323 = vsub.s32 %v2320, %v2322
      %v2324 = vrot.slane %v2310, %v2323
      %v2325 = vcombine.high %v2301, 0.0
      %v2326 = vcombine.high %v2308, 0.0
      %v2327 = vcombine.high %v2317, 0.0
      %v2328 = vcombine.high %v2324, 0.0
      %2330 = vrot.lane.b32.xlu0 %v2257, 16
      %v2331 = vpop.permute.xlu0 %2330
      %2334 = vrot.lane.b32.xlu0 %v2240, 32
      %v2335 = vpop.permute.xlu0 %2334
      %2338 = vrot.lane.b32.xlu0 %v2258, 48
      %v2339 = vpop.permute.xlu0 %2338
      %2342 = vrot.lane.b32.xlu0 %v2249, 64
      %v2343 = vpop.permute.xlu0 %2342
      %2346 = vrot.lane.b32.xlu0 %v2259, 80
      %v2347 = vpop.permute.xlu0 %2346
      %2350 = vrot.lane.b32.xlu0 %v2256, 96
      %v2351 = vpop.permute.xlu0 %2350
      %2354 = vrot.lane.b32.xlu0 %v2260, 112
      %v2355 = vpop.permute.xlu0 %2354
      %2358 = vrot.lane.b32.xlu0 %v2325, 16
      %v2359 = vpop.permute.xlu0 %2358
      %2362 = vrot.lane.b32.xlu0 %v2308, 32
      %v2363 = vpop.permute.xlu0 %2362
      %2366 = vrot.lane.b32.xlu0 %v2326, 48
      %v2367 = vpop.permute.xlu0 %2366
      %2370 = vrot.lane.b32.xlu0 %v2317, 64
      %v2371 = vpop.permute.xlu0 %2370
      %2374 = vrot.lane.b32.xlu0 %v2327, 80
      %v2375 = vpop.permute.xlu0 %2374
      %2378 = vrot.lane.b32.xlu0 %v2324, 96
      %v2379 = vpop.permute.xlu0 %2378
      %2382 = vrot.lane.b32.xlu0 %v2328, 112
      %v2383 = vpop.permute.xlu0 %2382
      %v2385 = vsel %vm434, %v2233, %v2331
      %v2386 = vsel %vm436, %v2385, %v2335
      %v2387 = vsel %vm438, %v2386, %v2339
      %v2388 = vsel %vm440, %v2387, %v2343
      %v2389 = vsel %vm442, %v2388, %v2347
      %v2390 = vsel %vm444, %v2389, %v2351
      %v2391 = vsel %vm446, %v2390, %v2355
      %v2392 = vsel %vm434, %v2301, %v2359
      %v2393 = vsel %vm436, %v2392, %v2363
      %v2394 = vsel %vm438, %v2393, %v2367
      %v2395 = vsel %vm440, %v2394, %v2371
      %v2396 = vsel %vm442, %v2395, %v2375
      %v2397 = vsel %vm444, %v2396, %v2379
      %v2398 = vsel %vm446, %v2397, %v2383
      %2399 = vst [vmem:[#allocation3 + $0x40] sm:$0xf] %v2391
      %2400 = vst [vmem:[#allocation3 + $0x48] sm:$0xf] %v2398
      %v2401 = vld [vmem:[%s1] sm:$0xff]
      %v2402 = vld [vmem:[#allocation3] sm:$0xff]
      %v2403 = vld [vmem:[#allocation3 + $0x8] sm:$0xff]
      %v2404 = vld [vmem:[#allocation3 + $0x10] sm:$0xff]
      %v2405 = vld [vmem:[#allocation3 + $0x18] sm:$0xff]
      %v2406 = vld [vmem:[#allocation3 + $0x20] sm:$0xff]
      %v2407 = vld [vmem:[#allocation3 + $0x28] sm:$0xff]
      %v2408 = vld [vmem:[#allocation3 + $0x30] sm:$0xff]
      %v2409 = vld [vmem:[#allocation3 + $0x38] sm:$0xff]
      %v2410 = vld [vmem:[#allocation3 + $0x40] sm:$0xf]
      %v2411 = vld [vmem:[#allocation3 + $0x48] sm:$0xf]
      %v2412 = vld [vmem:[%s2] sm:$0xff]
      %2414 = vset.pattern.permute.xlu0 0
      %2415 = vperm.xlu0 %2414, %v2412
      %v2416 = vpop.permute.xlu0 %2415
      %vm2418 = vcmask 293888
      %v2420 = vsel %vm2418, %v2401, 0
      %vm2422 = vcmask 1043456
      %v2424 = vsel %vm2422, %v2410, 0
      %v2427 = vsel %vm2422, %v2411, 0
      %2429 = vmatprep.subr.mxu0 0.0
      %2430 = vmatpush1.msra.mxu0 0.0
      %2431 = vmatprep.subr.mxu0 0.0
      %2432 = vmatpush1.msra.mxu0 0.0
      %2433 = vmatprep.subr.mxu0 0.0
      %2434 = vmatpush1.msra.mxu0 0.0
      %2435 = vmatprep.subr.mxu0 0.0
      %2436 = vmatpush1.msra.mxu0 0.0
      %2437 = vmatprep.subr.mxu0 0.0
      %2438 = vmatpush1.msra.mxu0 0.0
      %2439 = vmatprep.subr.mxu0 0.0
      %2440 = vmatpush1.msra.mxu0 0.0
      %2441 = vmatprep.subr.mxu0 0.0
      %2442 = vmatpush1.msra.mxu0 0.0
      %2443 = vmatprep.subr.mxu0 0.0
      %2444 = vmatpush1.msra.mxu0 0.0
      %2445 = vmatprep.subr.mxu0 0.0
      %2446 = vmatpush1.msra.mxu0 0.0
      %2447 = vmatprep.subr.mxu0 0.0
      %2448 = vmatpush1.msra.mxu0 0.0
      %2449 = vmatprep.subr.mxu0 0.0
      %2450 = vmatpush1.msra.mxu0 0.0
      %2451 = vmatprep.subr.mxu0 %v2427
      %2452 = vmatpush1.msra.mxu0 %v2424
      %2453 = vmatprep.subr.mxu0 %v2409
      %2454 = vmatpush1.msra.mxu0 %v2408
      %2455 = vmatprep.subr.mxu0 %v2407
      %2456 = vmatpush1.msra.mxu0 %v2406
      %2457 = vmatprep.subr.mxu0 %v2405
      %2458 = vmatpush1.msra.mxu0 %v2404
      %2459 = vmatprep.subr.mxu0 %v2403
      %2460 = vmatpush1.msra.mxu0 %v2402
      %2461 = vmatprep.subr.mxu0 0.0
      %2462 = vmatpush2.msra.mxu0 0.0
      %2463 = vmatprep.subr.mxu0 0.0
      %2464 = vmatpush2.msra.mxu0 0.0
      %2465 = vmatprep.subr.mxu0 0.0
      %2466 = vmatpush2.msra.mxu0 0.0
      %2467 = vmatprep.subr.mxu0 0.0
      %2468 = vmatpush2.msra.mxu0 0.0
      %2469 = vmatprep.subr.mxu0 0.0
      %2470 = vmatpush2.msra.mxu0 0.0
      %2471 = vmatprep.subr.mxu0 0.0
      %2472 = vmatpush2.msra.mxu0 0.0
      %2473 = vmatprep.subr.mxu0 0.0
      %2474 = vmatpush2.msra.mxu0 0.0
      %2475 = vmatprep.subr.mxu0 0.0
      %2476 = vmatpush2.msra.mxu0 0.0
      %2477 = vmatprep.subr.mxu0 0.0
      %2478 = vmatpush2.msra.mxu0 0.0
      %2479 = vmatprep.subr.mxu0 0.0
      %2480 = vmatpush2.msra.mxu0 0.0
      %2481 = vmatprep.subr.mxu0 0.0
      %2482 = vmatpush2.msra.mxu0 0.0
      %2483 = vmatprep.subr.mxu0 0.0
      %2484 = vmatpush2.msra.mxu0 0.0
      %2485 = vmatprep.subr.mxu0 0.0
      %2486 = vmatpush2.msra.mxu0 0.0
      %2487 = vmatprep.subr.mxu0 0.0
      %2488 = vmatpush2.msra.mxu0 0.0
      %2489 = vmatprep.subr.mxu0 0.0
      %2490 = vmatpush2.msra.mxu0 0.0
      %2491 = vmatprep.subr.mxu0 0.0
      %2492 = vmatpush2.msra.mxu0 0.0
      %2493 = vmatprep.mubr.f32.mxu0 0.0
      %2494 = vmatmul.mubr.f32.gmra.mxu0 %v2420
      %v2495 = vpop.f32.mrf.mxu0
      %v2496 = vadd.f32 %v2416, %v2495
      %v2497 = vpop.f32.mrf.mxu0
      %v2498 = vadd.f32 %v2416, %v2497
      %2499 = vdwg.mxu0
      %v2500 = vmax.f32 %v2496, 0.0
      %v2501 = vmax.f32 %v2498, 0.0
      %2502 = vst [vmem:[%s170] sm:$0xff] %v2500
      %2503 = vst [vmem:[%s170 + $0x8] sm:$0xff] %v2501
      %p2504 = scmp.lt.s32.totalorder %s14, 1
      %s2505 = scalar_select %p2504, %s14, 1
      %s2506 = smul.addr %s2505, 2
      %s2507 = smul.addr %s2506, 8
      %s2508 = scalar_lea.vmem %s3, %s2507
      // Predicated region
      $region33: #{basic_conv2d_pallas.1} parent=31 // pred_check
        %p2509 = pneg %p100
      $region34: #{basic_conv2d_pallas.1} parent=31 // pred_check_branch
        %2511 = sbr.rel (%p2509) target = $region36
      $region35: #{basic_conv2d_pallas.1} parent=31 // pred_region
        _
      $region36: #{basic_conv2d_pallas.1} parent=31 // pred_fallthru
        _
    $region32: #{basic_conv2d_pallas.1} parent=5 // pred_fallthru
      _
    %p2512 = scmp.le.s32.totalorder 2, %s9
    // Predicated region
    $region37: #{basic_conv2d_pallas.1} parent=5 // pred_check
      %p2513 = pneg %p2512
    $region38: #{basic_conv2d_pallas.1} parent=5 // pred_check_branch
      %2515 = sbr.rel (%p2513) target = $region40
    $region39: #{basic_conv2d_pallas.1} parent=5 // pred_region
      %s2516 = ssub.s32 %s9, 2
      // Predicated region
      $region41: #{basic_conv2d_pallas.1} parent=39 // pred_check
        %p2517 = pneg %p106
      $region42: #{basic_conv2d_pallas.1} parent=39 // pred_check_branch
        %2519 = sbr.rel (%p2517) target = $region44
      $region43: #{basic_conv2d_pallas.1} parent=39 // pred_region
        %p2520 = scmp.lt.s32.totalorder %s15, 1
        %s2521 = scalar_select %p2520, %s15, 1
        %s2522 = smul.addr %s2521, 2
        %s2523 = smul.addr %s2522, 8
        %s2524 = scalar_lea.vmem %s3, %s2523
      $region44: #{basic_conv2d_pallas.1} parent=39 // pred_fallthru
        _
    $region40: #{basic_conv2d_pallas.1} parent=5 // pred_fallthru
      _
  $region6: #{basic_conv2d_pallas.1} parent=0 // loop_footer
    %s13 = sadd.s32 1, %s9
  $region7: #{basic_conv2d_pallas.1} parent=0 // loop_footer_branch
    %8 = sbr.rel target = $region3
  $region8: #{basic_conv2d_pallas.1} parent=0 // loop_exit
    _

</llo_original>
